<compile_context>
chip_gen: v6e
topology: v6e:2x2x1
jax: 0.10.0
libtpu: 0.0.40
codegen_flags: <defaults>
</compile_context>

<pallas_src>
import jax
import jax.numpy as jnp
from jax.experimental import pallas as pl
from jax.experimental.pallas import tpu as pltpu


def _round_up(n, k):
    return (n + k - 1) // k * k


# ---------------------------------------------------------------------------
# Fused kernel: one batch tile of TB samples per grid step.
# Row layout of the conv1 stage: 16 rows per image, row j = q*6 + s holds the
# pooled output row r = 2*s + q (parity-major ordering); rows 12..15 are pad.
# ---------------------------------------------------------------------------
def _net_kernel(x_ref, w1_ref, b1_ref, w2_ref, b2_ref,
                wf1_ref, bf1_ref, wf2_ref, bf2_ref, o_ref):
    TB = o_ref.shape[0]
    f32 = jnp.float32
    bf16 = jnp.bfloat16

    # ---- conv1 + 2x2 maxpool + relu: one matmul, pool = aligned lane-group max
    xu = x_ref[...]                                              # [TB*16, 168] bf16
    c1 = jnp.dot(xu, w1_ref[...], preferred_element_type=f32)    # [TB*16, 512]
    m1 = jnp.maximum(jnp.maximum(c1[:, 0:128], c1[:, 128:256]),
                     jnp.maximum(c1[:, 256:384], c1[:, 384:512]))
    p1 = jnp.maximum(m1 + b1_ref[...], 0.0)                      # [TB*16, 128]

    # ---- conv2 input unfold: 6 unit-stride row slices -> lanes (K = 768) ----
    p1_3d = p1.reshape(TB, 16, 128)
    slabs = [p1_3d[:, off:off + 8, :] for off in (0, 6, 1, 7, 2, 8)]  # d = 0..5
    p1u = jnp.concatenate(slabs, axis=2).reshape(TB * 8, 768).astype(bf16)

    # ---- conv2 + 2x2 maxpool + relu -----------------------------------------
    # TODO(synk): Dropout2d / dropout are train-time only; eval mode == identity.
    c2 = jnp.dot(p1u, w2_ref[...], preferred_element_type=f32)   # [TB*8, 512]
    m2 = jnp.maximum(jnp.maximum(c2[:, 0:128], c2[:, 128:256]),
                     jnp.maximum(c2[:, 256:384], c2[:, 384:512]))
    p2 = jnp.maximum(m2 + b2_ref[...], 0.0)                      # [TB*8, 128]

    # ---- fc1: 4 accumulated dots over pooled rows (no lane concat) + relu ---
    p2_3d = p2.reshape(TB, 8, 128)                               # rows 0..3 valid
    h1 = jnp.zeros((TB, 128), f32)
    for r in range(4):
        h1 = h1 + jnp.dot(p2_3d[:, r, :].astype(bf16), wf1_ref[r],
                          preferred_element_type=f32)
    h1 = jnp.maximum(h1 + bf1_ref[...], 0.0)                     # [TB, 128]

    # ---- fc2 + log_softmax (pad lanes carry -1e30 bias -> exp underflows) ---
    logits = jnp.dot(h1.astype(bf16), wf2_ref[...],
                     preferred_element_type=f32) + bf2_ref[...]
    m = jnp.max(logits, axis=-1, keepdims=True)
    s = logits - m
    lse = jnp.log(jnp.sum(jnp.exp(s), axis=-1, keepdims=True))
    o_ref[...] = s - lse                                         # [TB, 128]


# ---------------------------------------------------------------------------
# Host-side one-time weight preparation: banded conv weights with the 2x2 pool
# folded into four N-groups of 128 lanes each, permuted / lane-padded fc1,
# lane-padded fc2.  Plain JAX under the same jit.
# ---------------------------------------------------------------------------
def _prepare_params(params):
    f32 = jnp.float32
    bf16 = jnp.bfloat16
    wc1 = params["w_conv1"].astype(f32)      # [10, 1, 5, 5]
    bc1 = params["b_conv1"].astype(f32)      # [10]
    wc2 = params["w_conv2"].astype(f32)      # [20, 10, 5, 5]
    bc2 = params["b_conv2"].astype(f32)      # [20]
    wf1 = params["w_fc1"].astype(f32)        # [50, 320]
    bf1 = params["b_fc1"].astype(f32)        # [50]
    wf2 = params["w_fc2"].astype(f32)        # [10, 50]
    bf2 = params["b_fc2"].astype(f32)        # [10]

    kh = jnp.arange(5)
    kw = jnp.arange(5)
    d6 = jnp.arange(6)
    col = jnp.arange(28)
    m12 = jnp.arange(12)
    j4 = jnp.arange(4)

    w1t = jnp.transpose(wc1[:, 0], (1, 2, 0))    # [kh, kw, c]
    w2t = jnp.transpose(wc2, (2, 3, 1, 0))       # [kh, kw, ci, cout]

    # Four pooling-window positions (dr, dc); each contributes one 128-lane
    # output group.  The 2x2 max-pool becomes a max over the four groups.
    w1_groups, w2_groups = [], []
    for dr in (0, 1):
        seld = (d6[:, None] == dr + kh[None, :]).astype(f32)             # [6, 5]
        for dc in (0, 1):
            # conv1: W1g[d*28 + col, m*10 + c] = wc1[c,0,kh,kw]
            #        iff d == dr + kh  and  col == 2m + dc + kw
            selc = (col[:, None, None]
                    == 2 * m12[None, None, :] + dc + kw[None, :, None]).astype(f32)
            g1 = jnp.einsum("dk,xwm,kwc->dxmc", seld, selc, w1t).reshape(168, 120)
            w1_groups.append(jnp.pad(g1, ((0, 0), (0, 8))))              # N 120->128

            # conv2: W2g[d*128 + m*10 + ci, J*20 + cout] = wc2[cout,ci,kh,kw]
            #        iff d == dr + kh  and  m == 2J + dc + kw
            selm = (m12[:, None, None]
                    == 2 * j4[None, None, :] + dc + kw[None, :, None]).astype(f32)
            g2 = jnp.einsum("dk,mwj,kwic->dmijc", seld, selm, w2t).reshape(6, 120, 80)
            g2 = jnp.pad(g2, ((0, 0), (0, 8), (0, 48))).reshape(768, 128)
            w2_groups.append(g2)

    W1 = jnp.concatenate(w1_groups, axis=1).astype(bf16)     # [168, 512]
    W2 = jnp.concatenate(w2_groups, axis=1).astype(bf16)     # [768, 512]
    b1t = jnp.pad(jnp.tile(bc1, 12), (0, 8)).reshape(1, 128)
    b2t = jnp.pad(jnp.tile(bc2, 4), (0, 48)).reshape(1, 128)

    # fc1: chunk[R][J*20 + c, out] = wf1[out, c*16 + R*4 + J]  (torch (c,h,w) flatten)
    wf1_r = wf1.reshape(50, 20, 4, 4)                              # [out, c, h, w]
    chunks = jnp.transpose(wf1_r, (2, 3, 1, 0)).reshape(4, 80, 50)  # [h][w*20+c, out]
    wf1p = jnp.zeros((4, 128, 128), f32).at[:, :80, :50].set(chunks).astype(bf16)
    bf1p = jnp.zeros((1, 128), f32).at[0, :50].set(bf1)

    # fc2: classes padded 10 -> 128 (zero weights, -1e30 bias on pad lanes)
    wf2p = jnp.zeros((128, 128), f32).at[:50, :10].set(wf2.T).astype(bf16)
    bf2p = jnp.full((1, 128), -1e30, f32).at[0, :10].set(bf2)

    return (W1, b1t, W2, b2t, wf1p, bf1p, wf2p, bf2p)


def _unfold_conv1_input(xs, Bp):
    """xs: [Bp, 28, 28] f32 -> [Bp*16, 168] bf16 lane-dense conv1 input.

    Row j = q*6 + s of image b holds the 6 input rows feeding pooled conv1
    output row r = 2*s + q (lanes = d*28 + col, input row = 2r + d); rows
    12..15 are zero pad so every in-kernel reshape stays (8,128)-aligned.
    """
    j = jnp.arange(12)
    r = (j % 6) * 2 + (j // 6)
    d = jnp.arange(6)
    row_idx = 2 * r[:, None] + d[None, :]                         # [12, 6]
    x6 = xs[:, row_idx, :].reshape(Bp, 12, 168)
    x6 = jnp.concatenate([x6, jnp.zeros((Bp, 4, 168), xs.dtype)], axis=1)
    return x6.reshape(Bp * 16, 168).astype(jnp.bfloat16)


# ---------------------------------------------------------------------------
# Wrapper
# ---------------------------------------------------------------------------
@jax.jit
def net_forward(x, params):
    """Pallas implementation of Net.forward (inference mode).  x: [B,1,28,28]."""
    B = x.shape[0]
    TB = 128 if B >= 128 else _round_up(max(B, 1), 8)   # fill the MXU M dim at scale
    Bp = _round_up(B, TB)

    xs = x.reshape(B, 28, 28).astype(jnp.float32)
    if Bp != B:
        xs = jnp.pad(xs, ((0, Bp - B), (0, 0), (0, 0)))
    x6 = _unfold_conv1_input(xs, Bp)                    # [Bp*16, 168] bf16
    W1, b1t, W2, b2t, wf1p, bf1p, wf2p, bf2p = _prepare_params(params)

    out = pl.pallas_call(
        _net_kernel,
        out_shape=jax.ShapeDtypeStruct((Bp, 128), jnp.float32),
        grid=(Bp // TB,),
        in_specs=[
            pl.BlockSpec((TB * 16, 168), lambda i: (i, 0)),   # unfolded input tile
            pl.BlockSpec((168, 512), lambda i: (0, 0)),       # conv1 banded weights (4 pool groups)
            pl.BlockSpec((1, 128), lambda i: (0, 0)),         # conv1 bias (tiled)
            pl.BlockSpec((768, 512), lambda i: (0, 0)),       # conv2 banded weights (4 pool groups)
            pl.BlockSpec((1, 128), lambda i: (0, 0)),         # conv2 bias (tiled)
            pl.BlockSpec((4, 128, 128), lambda i: (0, 0, 0)), # fc1 per-row chunks (padded)
            pl.BlockSpec((1, 128), lambda i: (0, 0)),         # fc1 bias (padded)
            pl.BlockSpec((128, 128), lambda i: (0, 0)),       # fc2 (lane-padded)
            pl.BlockSpec((1, 128), lambda i: (0, 0)),         # fc2 bias (lane-padded)
        ],
        out_specs=pl.BlockSpec((TB, 128), lambda i: (i, 0)),
        compiler_params=pltpu.CompilerParams(
            dimension_semantics=("parallel",),                # megacore / v7x 2-TC sharding
            vmem_limit_bytes=48 * 1024 * 1024),               # > v5e 16 MiB default, < v7x 64 MiB
    )(x6, W1, b1t, W2, b2t, wf1p, bf1p, wf2p, bf2p)

    return out[:B, :10]


# ---------------------------------------------------------------------------
# Pure-JAX reference for numerical validation
# ---------------------------------------------------------------------------
def reference_forward(x, p):
    def conv(x, w, b):
        out = jax.lax.conv_general_dilated(
            x, w, (1, 1), "VALID", dimension_numbers=("NCHW", "OIHW", "NCHW"))
        return out + b.reshape(1, -1, 1, 1)

    def pool(x):
        return jax.lax.reduce_window(
            x, -jnp.inf, jax.lax.max, (1, 1, 2, 2), (1, 1, 2, 2), "VALID")

    h = jnp.maximum(pool(conv(x, p["w_conv1"], p["b_conv1"])), 0.0)
    h = jnp.maximum(pool(conv(h, p["w_conv2"], p["b_conv2"])), 0.0)
    h = h.reshape(h.shape[0], 320)
    h = jnp.maximum(h @ p["w_fc1"].T + p["b_fc1"], 0.0)
    logits = h @ p["w_fc2"].T + p["b_fc2"]
    return jax.nn.log_softmax(logits, axis=1)


# ---------------------------------------------------------------------------
if __name__ == "__main__":
    key = jax.random.PRNGKey(0)
    kx, kp = jax.random.split(key)

    # Input must be 28x28 so the flatten yields 320 features (fc1 in_features).
    x = jax.random.normal(kx, (2, 1, 28, 28), dtype=jnp.float32)

    ks = jax.random.split(kp, 8)
    params = {
        "w_conv1": 0.10 * jax.random.normal(ks[0], (10, 1, 5, 5), jnp.float32),
        "b_conv1": 0.10 * jax.random.normal(ks[1], (10,), jnp.float32),
        "w_conv2": 0.05 * jax.random.normal(ks[2], (20, 10, 5, 5), jnp.float32),
        "b_conv2": 0.05 * jax.random.normal(ks[3], (20,), jnp.float32),
        "w_fc1": 0.05 * jax.random.normal(ks[4], (50, 320), jnp.float32),
        "b_fc1": 0.05 * jax.random.normal(ks[5], (50,), jnp.float32),
        "w_fc2": 0.10 * jax.random.normal(ks[6], (10, 50), jnp.float32),
        "b_fc2": 0.10 * jax.random.normal(ks[7], (10,), jnp.float32),
    }

    out = jax.block_until_ready(net_forward(x, params))
    assert out.shape == (2, 10) and out.dtype == jnp.float32

    ref = reference_forward(x, params)
    max_err = float(jnp.max(jnp.abs(out - ref)))
    # bf16 MXU operands (f32 accumulate): loosened tolerance per review.
    assert max_err < 5e-2, f"mismatch vs reference: {max_err}"

    print("KERNEL_OK")
</pallas_src>

<mosaic_0001>
module attributes {stable_mosaic.version = 11 : i64} {
  func.func @_net_kernel(%arg0: i32, %arg1: memref<128x168xbf16, #tpu.memory_space<vmem>>, %arg2: memref<168x512xbf16, #tpu.memory_space<vmem>>, %arg3: memref<1x128xf32, #tpu.memory_space<vmem>>, %arg4: memref<768x512xbf16, #tpu.memory_space<vmem>>, %arg5: memref<1x128xf32, #tpu.memory_space<vmem>>, %arg6: memref<4x128x128xbf16, #tpu.memory_space<vmem>>, %arg7: memref<1x128xf32, #tpu.memory_space<vmem>>, %arg8: memref<128x128xbf16, #tpu.memory_space<vmem>>, %arg9: memref<1x128xf32, #tpu.memory_space<vmem>>, %arg10: memref<8x128xf32, #tpu.memory_space<vmem>>) attributes {dimension_semantics = [#tpu.dimension_semantics<parallel>], iteration_bounds = array<i64: 1>, scalar_prefetch = 0 : i64, scratch_operands = 0 : i64, tpu.core_type = #tpu.core_type<tc>, window_params = [{transform_indices = @transform_0, window_bounds = array<i64: 128, 168>}, {pipeline_mode = #tpu.pipeline_mode<synchronous>, transform_indices = @transform_1, window_bounds = array<i64: 168, 512>}, {pipeline_mode = #tpu.pipeline_mode<synchronous>, transform_indices = @transform_2, window_bounds = array<i64: 1, 128>}, {pipeline_mode = #tpu.pipeline_mode<synchronous>, transform_indices = @transform_3, window_bounds = array<i64: 768, 512>}, {pipeline_mode = #tpu.pipeline_mode<synchronous>, transform_indices = @transform_4, window_bounds = array<i64: 1, 128>}, {pipeline_mode = #tpu.pipeline_mode<synchronous>, transform_indices = @transform_5, window_bounds = array<i64: 4, 128, 128>}, {pipeline_mode = #tpu.pipeline_mode<synchronous>, transform_indices = @transform_6, window_bounds = array<i64: 1, 128>}, {pipeline_mode = #tpu.pipeline_mode<synchronous>, transform_indices = @transform_7, window_bounds = array<i64: 128, 128>}, {pipeline_mode = #tpu.pipeline_mode<synchronous>, transform_indices = @transform_8, window_bounds = array<i64: 1, 128>}, {transform_indices = @transform_9, window_bounds = array<i64: 8, 128>}]} {
    %c0 = arith.constant 0 : index
    %c0_0 = arith.constant 0 : index
    %0 = vector.load %arg1[%c0, %c0_0] : memref<128x168xbf16, #tpu.memory_space<vmem>>, vector<128x168xbf16>
    %c0_1 = arith.constant 0 : index
    %c0_2 = arith.constant 0 : index
    %1 = vector.load %arg2[%c0_1, %c0_2] : memref<168x512xbf16, #tpu.memory_space<vmem>>, vector<168x512xbf16>
    %cst = arith.constant dense<0.000000e+00> : vector<128x512xf32>
    %2 = tpu.matmul %0, %1, %cst {dimension_numbers = #tpu.dot_dimension_numbers<[1], [0], [0], [1], [0, 0, 1, 1], [], []>} : vector<128x168xbf16>, vector<168x512xbf16>, vector<128x512xf32> -> vector<128x512xf32>
    %3 = vector.extract_strided_slice %2 {offsets = [0, 0], sizes = [128, 128], strides = [1, 1]} : vector<128x512xf32> to vector<128x128xf32>
    %4 = vector.extract_strided_slice %2 {offsets = [0, 128], sizes = [128, 128], strides = [1, 1]} : vector<128x512xf32> to vector<128x128xf32>
    %5 = arith.maximumf %3, %4 : vector<128x128xf32>
    %6 = vector.extract_strided_slice %2 {offsets = [0, 256], sizes = [128, 128], strides = [1, 1]} : vector<128x512xf32> to vector<128x128xf32>
    %7 = vector.extract_strided_slice %2 {offsets = [0, 384], sizes = [128, 128], strides = [1, 1]} : vector<128x512xf32> to vector<128x128xf32>
    %8 = arith.maximumf %6, %7 : vector<128x128xf32>
    %9 = arith.maximumf %5, %8 : vector<128x128xf32>
    %c0_3 = arith.constant 0 : index
    %c0_4 = arith.constant 0 : index
    %10 = vector.load %arg3[%c0_3, %c0_4] : memref<1x128xf32, #tpu.memory_space<vmem>>, vector<1x128xf32>
    %11 = vector.broadcast %10 : vector<1x128xf32> to vector<128x128xf32>
    %12 = arith.addf %9, %11 : vector<128x128xf32>
    %cst_5 = arith.constant 0.000000e+00 : f32
    %13 = vector.broadcast %cst_5 : f32 to vector<128x128xf32>
    %14 = arith.maximumf %12, %13 : vector<128x128xf32>
    %15 = vector.shape_cast %14 : vector<128x128xf32> to vector<8x16x128xf32>
    %16 = vector.extract_strided_slice %15 {offsets = [0, 0, 0], sizes = [8, 8, 128], strides = [1, 1, 1]} : vector<8x16x128xf32> to vector<8x8x128xf32>
    %17 = vector.extract_strided_slice %15 {offsets = [0, 6, 0], sizes = [8, 8, 128], strides = [1, 1, 1]} : vector<8x16x128xf32> to vector<8x8x128xf32>
    %18 = vector.extract_strided_slice %15 {offsets = [0, 1, 0], sizes = [8, 8, 128], strides = [1, 1, 1]} : vector<8x16x128xf32> to vector<8x8x128xf32>
    %19 = vector.extract_strided_slice %15 {offsets = [0, 7, 0], sizes = [8, 8, 128], strides = [1, 1, 1]} : vector<8x16x128xf32> to vector<8x8x128xf32>
    %20 = vector.extract_strided_slice %15 {offsets = [0, 2, 0], sizes = [8, 8, 128], strides = [1, 1, 1]} : vector<8x16x128xf32> to vector<8x8x128xf32>
    %21 = vector.extract_strided_slice %15 {offsets = [0, 8, 0], sizes = [8, 8, 128], strides = [1, 1, 1]} : vector<8x16x128xf32> to vector<8x8x128xf32>
    %22 = tpu.concatenate %16, %17, %18, %19, %20, %21 in 2 : vector<8x8x128xf32>, vector<8x8x128xf32>, vector<8x8x128xf32>, vector<8x8x128xf32>, vector<8x8x128xf32>, vector<8x8x128xf32> -> vector<8x8x768xf32>
    %23 = vector.shape_cast %22 : vector<8x8x768xf32> to vector<64x768xf32>
    %24 = arith.truncf %23 : vector<64x768xf32> to vector<64x768xbf16>
    %c0_6 = arith.constant 0 : index
    %c0_7 = arith.constant 0 : index
    %25 = vector.load %arg4[%c0_6, %c0_7] : memref<768x512xbf16, #tpu.memory_space<vmem>>, vector<768x512xbf16>
    %cst_8 = arith.constant dense<0.000000e+00> : vector<64x512xf32>
    %26 = tpu.matmul %24, %25, %cst_8 {dimension_numbers = #tpu.dot_dimension_numbers<[1], [0], [0], [1], [0, 0, 1, 1], [], []>} : vector<64x768xbf16>, vector<768x512xbf16>, vector<64x512xf32> -> vector<64x512xf32>
    %27 = vector.extract_strided_slice %26 {offsets = [0, 0], sizes = [64, 128], strides = [1, 1]} : vector<64x512xf32> to vector<64x128xf32>
    %28 = vector.extract_strided_slice %26 {offsets = [0, 128], sizes = [64, 128], strides = [1, 1]} : vector<64x512xf32> to vector<64x128xf32>
    %29 = arith.maximumf %27, %28 : vector<64x128xf32>
    %30 = vector.extract_strided_slice %26 {offsets = [0, 256], sizes = [64, 128], strides = [1, 1]} : vector<64x512xf32> to vector<64x128xf32>
    %31 = vector.extract_strided_slice %26 {offsets = [0, 384], sizes = [64, 128], strides = [1, 1]} : vector<64x512xf32> to vector<64x128xf32>
    %32 = arith.maximumf %30, %31 : vector<64x128xf32>
    %33 = arith.maximumf %29, %32 : vector<64x128xf32>
    %c0_9 = arith.constant 0 : index
    %c0_10 = arith.constant 0 : index
    %34 = vector.load %arg5[%c0_9, %c0_10] : memref<1x128xf32, #tpu.memory_space<vmem>>, vector<1x128xf32>
    %35 = vector.broadcast %34 : vector<1x128xf32> to vector<64x128xf32>
    %36 = arith.addf %33, %35 : vector<64x128xf32>
    %cst_11 = arith.constant 0.000000e+00 : f32
    %37 = vector.broadcast %cst_11 : f32 to vector<64x128xf32>
    %38 = arith.maximumf %36, %37 : vector<64x128xf32>
    %39 = vector.shape_cast %38 : vector<64x128xf32> to vector<8x8x128xf32>
    %cst_12 = arith.constant 0.000000e+00 : f32
    %40 = vector.broadcast %cst_12 : f32 to vector<8x128xf32>
    %41 = vector.extract_strided_slice %39 {offsets = [0, 0, 0], sizes = [8, 1, 128], strides = [1, 1, 1]} : vector<8x8x128xf32> to vector<8x1x128xf32>
    %42 = vector.shape_cast %41 : vector<8x1x128xf32> to vector<8x128xf32>
    %43 = arith.truncf %42 : vector<8x128xf32> to vector<8x128xbf16>
    %c0_13 = arith.constant 0 : index
    %c0_14 = arith.constant 0 : index
    %c0_15 = arith.constant 0 : index
    %44 = vector.load %arg6[%c0_13, %c0_14, %c0_15] : memref<4x128x128xbf16, #tpu.memory_space<vmem>>, vector<1x128x128xbf16>
    %45 = vector.shape_cast %44 : vector<1x128x128xbf16> to vector<128x128xbf16>
    %cst_16 = arith.constant dense<0.000000e+00> : vector<8x128xf32>
    %46 = tpu.matmul %43, %45, %cst_16 {dimension_numbers = #tpu.dot_dimension_numbers<[1], [0], [0], [1], [0, 0, 1, 1], [], []>} : vector<8x128xbf16>, vector<128x128xbf16>, vector<8x128xf32> -> vector<8x128xf32>
    %47 = arith.addf %40, %46 : vector<8x128xf32>
    %48 = vector.extract_strided_slice %39 {offsets = [0, 1, 0], sizes = [8, 1, 128], strides = [1, 1, 1]} : vector<8x8x128xf32> to vector<8x1x128xf32>
    %49 = vector.shape_cast %48 : vector<8x1x128xf32> to vector<8x128xf32>
    %50 = arith.truncf %49 : vector<8x128xf32> to vector<8x128xbf16>
    %c1 = arith.constant 1 : index
    %c0_17 = arith.constant 0 : index
    %c0_18 = arith.constant 0 : index
    %51 = vector.load %arg6[%c1, %c0_17, %c0_18] : memref<4x128x128xbf16, #tpu.memory_space<vmem>>, vector<1x128x128xbf16>
    %52 = vector.shape_cast %51 : vector<1x128x128xbf16> to vector<128x128xbf16>
    %cst_19 = arith.constant dense<0.000000e+00> : vector<8x128xf32>
    %53 = tpu.matmul %50, %52, %cst_19 {dimension_numbers = #tpu.dot_dimension_numbers<[1], [0], [0], [1], [0, 0, 1, 1], [], []>} : vector<8x128xbf16>, vector<128x128xbf16>, vector<8x128xf32> -> vector<8x128xf32>
    %54 = arith.addf %47, %53 : vector<8x128xf32>
    %55 = vector.extract_strided_slice %39 {offsets = [0, 2, 0], sizes = [8, 1, 128], strides = [1, 1, 1]} : vector<8x8x128xf32> to vector<8x1x128xf32>
    %56 = vector.shape_cast %55 : vector<8x1x128xf32> to vector<8x128xf32>
    %57 = arith.truncf %56 : vector<8x128xf32> to vector<8x128xbf16>
    %c2 = arith.constant 2 : index
    %c0_20 = arith.constant 0 : index
    %c0_21 = arith.constant 0 : index
    %58 = vector.load %arg6[%c2, %c0_20, %c0_21] : memref<4x128x128xbf16, #tpu.memory_space<vmem>>, vector<1x128x128xbf16>
    %59 = vector.shape_cast %58 : vector<1x128x128xbf16> to vector<128x128xbf16>
    %cst_22 = arith.constant dense<0.000000e+00> : vector<8x128xf32>
    %60 = tpu.matmul %57, %59, %cst_22 {dimension_numbers = #tpu.dot_dimension_numbers<[1], [0], [0], [1], [0, 0, 1, 1], [], []>} : vector<8x128xbf16>, vector<128x128xbf16>, vector<8x128xf32> -> vector<8x128xf32>
    %61 = arith.addf %54, %60 : vector<8x128xf32>
    %62 = vector.extract_strided_slice %39 {offsets = [0, 3, 0], sizes = [8, 1, 128], strides = [1, 1, 1]} : vector<8x8x128xf32> to vector<8x1x128xf32>
    %63 = vector.shape_cast %62 : vector<8x1x128xf32> to vector<8x128xf32>
    %64 = arith.truncf %63 : vector<8x128xf32> to vector<8x128xbf16>
    %c3 = arith.constant 3 : index
    %c0_23 = arith.constant 0 : index
    %c0_24 = arith.constant 0 : index
    %65 = vector.load %arg6[%c3, %c0_23, %c0_24] : memref<4x128x128xbf16, #tpu.memory_space<vmem>>, vector<1x128x128xbf16>
    %66 = vector.shape_cast %65 : vector<1x128x128xbf16> to vector<128x128xbf16>
    %cst_25 = arith.constant dense<0.000000e+00> : vector<8x128xf32>
    %67 = tpu.matmul %64, %66, %cst_25 {dimension_numbers = #tpu.dot_dimension_numbers<[1], [0], [0], [1], [0, 0, 1, 1], [], []>} : vector<8x128xbf16>, vector<128x128xbf16>, vector<8x128xf32> -> vector<8x128xf32>
    %68 = arith.addf %61, %67 : vector<8x128xf32>
    %c0_26 = arith.constant 0 : index
    %c0_27 = arith.constant 0 : index
    %69 = vector.load %arg7[%c0_26, %c0_27] : memref<1x128xf32, #tpu.memory_space<vmem>>, vector<1x128xf32>
    %70 = vector.broadcast %69 : vector<1x128xf32> to vector<8x128xf32>
    %71 = arith.addf %68, %70 : vector<8x128xf32>
    %cst_28 = arith.constant 0.000000e+00 : f32
    %72 = vector.broadcast %cst_28 : f32 to vector<8x128xf32>
    %73 = arith.maximumf %71, %72 : vector<8x128xf32>
    %74 = arith.truncf %73 : vector<8x128xf32> to vector<8x128xbf16>
    %c0_29 = arith.constant 0 : index
    %c0_30 = arith.constant 0 : index
    %75 = vector.load %arg8[%c0_29, %c0_30] : memref<128x128xbf16, #tpu.memory_space<vmem>>, vector<128x128xbf16>
    %cst_31 = arith.constant dense<0.000000e+00> : vector<8x128xf32>
    %76 = tpu.matmul %74, %75, %cst_31 {dimension_numbers = #tpu.dot_dimension_numbers<[1], [0], [0], [1], [0, 0, 1, 1], [], []>} : vector<8x128xbf16>, vector<128x128xbf16>, vector<8x128xf32> -> vector<8x128xf32>
    %c0_32 = arith.constant 0 : index
    %c0_33 = arith.constant 0 : index
    %77 = vector.load %arg9[%c0_32, %c0_33] : memref<1x128xf32, #tpu.memory_space<vmem>>, vector<1x128xf32>
    %78 = vector.broadcast %77 : vector<1x128xf32> to vector<8x128xf32>
    %79 = arith.addf %76, %78 : vector<8x128xf32>
    %cst_34 = arith.constant dense<0xFF800000> : vector<8xf32>
    %80 = vector.multi_reduction <maximumf>, %79, %cst_34 [1] : vector<8x128xf32> to vector<8xf32>
    %81 = vector.shape_cast %80 : vector<8xf32> to vector<8x1xf32>
    %82 = vector.broadcast %81 : vector<8x1xf32> to vector<8x128xf32>
    %83 = arith.subf %79, %82 : vector<8x128xf32>
    %84 = math.exp %83 : vector<8x128xf32>
    %cst_35 = arith.constant dense<0.000000e+00> : vector<8xf32>
    %85 = vector.multi_reduction <add>, %84, %cst_35 [1] : vector<8x128xf32> to vector<8xf32>
    %86 = vector.shape_cast %85 : vector<8xf32> to vector<8x1xf32>
    %87 = math.log %86 : vector<8x1xf32>
    %88 = vector.broadcast %87 : vector<8x1xf32> to vector<8x128xf32>
    %89 = arith.subf %83, %88 : vector<8x128xf32>
    %c0_36 = arith.constant 0 : index
    %c0_37 = arith.constant 0 : index
    %90 = vector.load %arg10[%c0_36, %c0_37] : memref<8x128xf32, #tpu.memory_space<vmem>>, vector<8x128xf32>
    tpu.vector_store %arg10[%c0_36, %c0_37], %89 {strides = array<i32>} : memref<8x128xf32, #tpu.memory_space<vmem>>, vector<8x128xf32>,
    return
  }
  func.func @transform_0(%arg0: i32) -> (i32, i32) {
    %c0_i32 = arith.constant 0 : i32
    %c0_i32_0 = arith.constant 0 : i32
    return %arg0, %c0_i32 : i32, i32
  }
  func.func @transform_1(%arg0: i32) -> (i32, i32) {
    %c0_i32 = arith.constant 0 : i32
    %c0_i32_0 = arith.constant 0 : i32
    %c0_i32_1 = arith.constant 0 : i32
    return %c0_i32, %c0_i32_0 : i32, i32
  }
  func.func @transform_2(%arg0: i32) -> (i32, i32) {
    %c0_i32 = arith.constant 0 : i32
    %c0_i32_0 = arith.constant 0 : i32
    %c0_i32_1 = arith.constant 0 : i32
    return %c0_i32, %c0_i32_0 : i32, i32
  }
  func.func @transform_3(%arg0: i32) -> (i32, i32) {
    %c0_i32 = arith.constant 0 : i32
    %c0_i32_0 = arith.constant 0 : i32
    %c0_i32_1 = arith.constant 0 : i32
    return %c0_i32, %c0_i32_0 : i32, i32
  }
  func.func @transform_4(%arg0: i32) -> (i32, i32) {
    %c0_i32 = arith.constant 0 : i32
    %c0_i32_0 = arith.constant 0 : i32
    %c0_i32_1 = arith.constant 0 : i32
    return %c0_i32, %c0_i32_0 : i32, i32
  }
  func.func @transform_5(%arg0: i32) -> (i32, i32, i32) {
    %c0_i32 = arith.constant 0 : i32
    %c0_i32_0 = arith.constant 0 : i32
    %c0_i32_1 = arith.constant 0 : i32
    %c0_i32_2 = arith.constant 0 : i32
    return %c0_i32, %c0_i32_0, %c0_i32_1 : i32, i32, i32
  }
  func.func @transform_6(%arg0: i32) -> (i32, i32) {
    %c0_i32 = arith.constant 0 : i32
    %c0_i32_0 = arith.constant 0 : i32
    %c0_i32_1 = arith.constant 0 : i32
    return %c0_i32, %c0_i32_0 : i32, i32
  }
  func.func @transform_7(%arg0: i32) -> (i32, i32) {
    %c0_i32 = arith.constant 0 : i32
    %c0_i32_0 = arith.constant 0 : i32
    %c0_i32_1 = arith.constant 0 : i32
    return %c0_i32, %c0_i32_0 : i32, i32
  }
  func.func @transform_8(%arg0: i32) -> (i32, i32) {
    %c0_i32 = arith.constant 0 : i32
    %c0_i32_0 = arith.constant 0 : i32
    %c0_i32_1 = arith.constant 0 : i32
    return %c0_i32, %c0_i32_0 : i32, i32
  }
  func.func @transform_9(%arg0: i32) -> (i32, i32) {
    %c0_i32 = arith.constant 0 : i32
    %c0_i32_0 = arith.constant 0 : i32
    return %arg0, %c0_i32 : i32, i32
  }
}

</mosaic_0001>

<llo_original>
// kernel: tile.13
$region0: #{tile.13}
  #allocation0 [shape = 's32[1]{0}', space=sflag, size = 0x4, scoped, tag = 'scoped memory for tile.13']
  %s0 = inlined_call_operand.vmem [shape: f32[10], index: 0, kind: input, shape index: {}]
  %s1 = inlined_call_operand.vmem [shape: f32[12,10], index: 1, kind: output, shape index: {}]
  // Predicated region
  $region2: #{tile.13} parent=0 // pred_check
    _
  $region3: #{tile.13} parent=0 // pred_check_branch
    %3 = sbr.rel (0) target = $region5
  $region4: #{tile.13} parent=0 // pred_region
    _
  $region5: #{tile.13} parent=0 // pred_fallthru
    _
  %v4 = vld [vmem:[%s0] ss:$0 sm:$0xff]
  %5 = vst [vmem:[%s1] sm:$0xff] %v4
  %s6 = scalar_lea.vmem %s1, 8
  %7 = vst [vmem:[%s6] sm:$0xff] %v4

// kernel: tile.14
$region0: #{tile.14}
  %s0 = inlined_call_operand.vmem [shape: f32[12,10], index: 0, kind: input, shape index: {}]
  %s1 = inlined_call_operand.vmem [shape: f32[120], index: 1, kind: output, shape index: {}]
  $region1: #{tile.14} parent=0
    #allocation0 [shape = 'u8[4096]{0}', space=vmem, size = 0x1000, scoped, tag = 'scoped mem for output reshape']
    %v2 = vld [vmem:[%s0] sm:$0x1]
    %vm3 = vcmask 80896
    %4 = vst.msk [vmem:[#allocation0] sm:$0x1] %vm3, %v2
    %s5 = scalar_lea.vmem %s0, 11
    %v6 = vld [vmem:[%s5] sm:$0x1]
    %7 = vrot.lane.b32.xlu0 %v6, 110
    %v8 = vpop.permute.xlu0 %7
    %vm9 = vcmask 982896
    %10 = vst.msk [vmem:[#allocation0] sm:$0x1] %vm9, %v8
    %s11 = scalar_lea.vmem %s0, 10
    %v12 = vld [vmem:[%s11] sm:$0x1]
    %13 = vrot.lane.b32.xlu0 %v12, 100
    %v14 = vpop.permute.xlu0 %13
    %vm15 = vcmask 900896
    %16 = vst.msk [vmem:[#allocation0] sm:$0x1] %vm15, %v14
    %s17 = scalar_lea.vmem %s0, 9
    %v18 = vld [vmem:[%s17] sm:$0x1]
    %19 = vrot.lane.b32.xlu0 %v18, 90
    %v20 = vpop.permute.xlu0 %19
    %vm21 = vcmask 818896
    %22 = vst.msk [vmem:[#allocation0] sm:$0x1] %vm21, %v20
    %s23 = scalar_lea.vmem %s0, 8
    %v24 = vld [vmem:[%s23] sm:$0x1]
    %25 = vrot.lane.b32.xlu0 %v24, 80
    %v26 = vpop.permute.xlu0 %25
    %vm27 = vcmask 736896
    %28 = vst.msk [vmem:[#allocation0] sm:$0x1] %vm27, %v26
    %s29 = scalar_lea.vmem %s0, 7
    %v30 = vld [vmem:[%s29] sm:$0x1]
    %31 = vrot.lane.b32.xlu0 %v30, 70
    %v32 = vpop.permute.xlu0 %31
    %vm33 = vcmask 654896
    %34 = vst.msk [vmem:[#allocation0] sm:$0x1] %vm33, %v32
    %s35 = scalar_lea.vmem %s0, 6
    %v36 = vld [vmem:[%s35] sm:$0x1]
    %37 = vrot.lane.b32.xlu0 %v36, 60
    %v38 = vpop.permute.xlu0 %37
    %vm39 = vcmask 572896
    %40 = vst.msk [vmem:[#allocation0] sm:$0x1] %vm39, %v38
    %s41 = scalar_lea.vmem %s0, 5
    %v42 = vld [vmem:[%s41] sm:$0x1]
    %43 = vrot.lane.b32.xlu0 %v42, 50
    %v44 = vpop.permute.xlu0 %43
    %vm45 = vcmask 490896
    %46 = vst.msk [vmem:[#allocation0] sm:$0x1] %vm45, %v44
    %s47 = scalar_lea.vmem %s0, 4
    %v48 = vld [vmem:[%s47] sm:$0x1]
    %49 = vrot.lane.b32.xlu0 %v48, 40
    %v50 = vpop.permute.xlu0 %49
    %vm51 = vcmask 408896
    %52 = vst.msk [vmem:[#allocation0] sm:$0x1] %vm51, %v50
    %s53 = scalar_lea.vmem %s0, 3
    %v54 = vld [vmem:[%s53] sm:$0x1]
    %55 = vrot.lane.b32.xlu0 %v54, 30
    %v56 = vpop.permute.xlu0 %55
    %vm57 = vcmask 326896
    %58 = vst.msk [vmem:[#allocation0] sm:$0x1] %vm57, %v56
    %s59 = scalar_lea.vmem %s0, 2
    %v60 = vld [vmem:[%s59] sm:$0x1]
    %61 = vrot.lane.b32.xlu0 %v60, 20
    %v62 = vpop.permute.xlu0 %61
    %vm63 = vcmask 244896
    %64 = vst.msk [vmem:[#allocation0] sm:$0x1] %vm63, %v62
    %s65 = scalar_lea.vmem %s0, 1
    %v66 = vld [vmem:[%s65] sm:$0x1]
    %67 = vrot.lane.b32.xlu0 %v66, 10
    %v68 = vpop.permute.xlu0 %67
    %vm69 = vcmask 162896
    %70 = vst.msk [vmem:[#allocation0] sm:$0x1] %vm69, %v68
    %s72 = sshll.u32 1, 1
    %s73 = ssub.s32 %s72, 1
    %v75 = vld [vmem:[#allocation0] sm:%s73]
    %s76 = sshll.u32 1, 1
    %s77 = ssub.s32 %s76, 1
    %78 = vst [vmem:[%s1] sm:%s77] %v75

// kernel: tile.18
$region0: #{tile.18}
  #allocation0 [shape = 's32[1]{0}', space=sflag, size = 0x4, scoped, tag = 'scoped memory for tile.18']
  %s0 = inlined_call_operand.vmem [shape: f32[20], index: 0, kind: input, shape index: {}]
  %s1 = inlined_call_operand.vmem [shape: f32[4,20], index: 1, kind: output, shape index: {}]
  // Predicated region
  $region2: #{tile.18} parent=0 // pred_check
    _
  $region3: #{tile.18} parent=0 // pred_check_branch
    %3 = sbr.rel (0) target = $region5
  $region4: #{tile.18} parent=0 // pred_region
    _
  $region5: #{tile.18} parent=0 // pred_fallthru
    _
  %v4 = vld [vmem:[%s0] ss:$0 sm:$0xff]
  %5 = vst [vmem:[%s1] sm:$0xf] %v4

// kernel: tile.19
$region0: #{tile.19}
  %s0 = inlined_call_operand.vmem [shape: f32[4,20], index: 0, kind: input, shape index: {}]
  %s1 = inlined_call_operand.vmem [shape: f32[80], index: 1, kind: output, shape index: {}]
  $region1: #{tile.19} parent=0
    #allocation0 [shape = 'u8[4096]{0}', space=vmem, size = 0x1000, scoped, tag = 'scoped mem for output reshape']
    #allocation1 [shape = 'u8[4096]{0}', space=vmem, size = 0x1000, scoped, tag = 'scoped mem for input reshape']
    %s3 = sshll.u32 1, 4
    %s4 = ssub.s32 %s3, 1
    %v5 = vld [vmem:[%s0] sm:%s4]
    %6 = vst [vmem:[#allocation1] sm:%s4] %v5
    %v7 = vld [vmem:[#allocation1] sm:$0x1]
    %vm8 = vcmask 162816
    %9 = vst.msk [vmem:[#allocation0] sm:$0x1] %vm8, %v7
    %s10 = scalar_lea.vmem [#allocation1], 3
    %v11 = vld [vmem:[%s10] sm:$0x1]
    %12 = vrot.lane.b32.xlu0 %v11, 60
    %v13 = vpop.permute.xlu0 %12
    %vm14 = vcmask 654816
    %15 = vst.msk [vmem:[#allocation0] sm:$0x1] %vm14, %v13
    %s16 = scalar_lea.vmem [#allocation1], 2
    %v17 = vld [vmem:[%s16] sm:$0x1]
    %18 = vrot.lane.b32.xlu0 %v17, 40
    %v19 = vpop.permute.xlu0 %18
    %vm20 = vcmask 490816
    %21 = vst.msk [vmem:[#allocation0] sm:$0x1] %vm20, %v19
    %s22 = scalar_lea.vmem [#allocation1], 1
    %v23 = vld [vmem:[%s22] sm:$0x1]
    %24 = vrot.lane.b32.xlu0 %v23, 20
    %v25 = vpop.permute.xlu0 %24
    %vm26 = vcmask 326816
    %27 = vst.msk [vmem:[#allocation0] sm:$0x1] %vm26, %v25
    %s29 = sshll.u32 1, 1
    %s30 = ssub.s32 %s29, 1
    %v32 = vld [vmem:[#allocation0] sm:%s30]
    %s33 = sshll.u32 1, 1
    %s34 = ssub.s32 %s33, 1
    %35 = vst [vmem:[%s1] sm:%s34] %v32

// kernel: net_forward.1
$region0: #{net_forward.1}
  #allocation0 [shape = 'u32[]', space=smem, size = 0x4, offset = 0x4, fixed_abs, tag = 'smem constant byte address 0x4 - core index']
  #allocation1 [shape = 'u32[144,128]{1,0:T(1,128)}', space=vmem, size = 0x12000, scoped, tag = 'internal scratch']
  %s0 = inlined_call_operand.vmem [shape: bf16[128,168], index: 0, kind: input, shape index: {}]
  %s1 = inlined_call_operand.vmem [shape: bf16[168,512], index: 1, kind: input, shape index: {}]
  %s2 = inlined_call_operand.vmem [shape: f32[1,128], index: 2, kind: input, shape index: {}]
  %s3 = inlined_call_operand.vmem [shape: bf16[768,512], index: 3, kind: input, shape index: {}]
  %s4 = inlined_call_operand.vmem [shape: f32[1,128], index: 4, kind: input, shape index: {}]
  %s5 = inlined_call_operand.vmem [shape: bf16[4,128,128], index: 5, kind: input, shape index: {}]
  %s6 = inlined_call_operand.vmem [shape: f32[1,128], index: 6, kind: input, shape index: {}]
  %s7 = inlined_call_operand.vmem [shape: bf16[128,128], index: 7, kind: input, shape index: {}]
  %s8 = inlined_call_operand.vmem [shape: f32[1,128], index: 8, kind: input, shape index: {}]
  %s9 = inlined_call_operand.vmem [shape: f32[8,128], index: 9, kind: output, shape index: {}]
  %s10 = sld [smem:[#allocation0]]
  $region46: #{net_forward.1} parent=0
    _
  %s12 = ssub.s32 1, %s10
  %s13 = scalar_select 0, %s12, %s10
  // Predicated region
  $region2: #{net_forward.1} parent=0 // pred_check
    _
  $region3: #{net_forward.1} parent=0 // pred_check_branch
    %15 = sbr.rel (0) target = $region5
  $region4: #{net_forward.1} parent=0 // pred_region
    _
  $region5: #{net_forward.1} parent=0 // pred_fallthru
    _
  // Predicated region
  $region6: #{net_forward.1} parent=0 // pred_check
    _
  $region7: #{net_forward.1} parent=0 // pred_check_branch
    %17 = sbr.rel (0) target = $region9
  $region8: #{net_forward.1} parent=0 // pred_region
    _
  $region9: #{net_forward.1} parent=0 // pred_fallthru
    _
  // Predicated region
  $region10: #{net_forward.1} parent=0 // pred_check
    _
  $region11: #{net_forward.1} parent=0 // pred_check_branch
    %19 = sbr.rel (0) target = $region13
  $region12: #{net_forward.1} parent=0 // pred_region
    _
  $region13: #{net_forward.1} parent=0 // pred_fallthru
    _
  // Predicated region
  $region14: #{net_forward.1} parent=0 // pred_check
    _
  $region15: #{net_forward.1} parent=0 // pred_check_branch
    %21 = sbr.rel (0) target = $region17
  $region16: #{net_forward.1} parent=0 // pred_region
    _
  $region17: #{net_forward.1} parent=0 // pred_fallthru
    _
  // Predicated region
  $region18: #{net_forward.1} parent=0 // pred_check
    _
  $region19: #{net_forward.1} parent=0 // pred_check_branch
    %23 = sbr.rel (0) target = $region21
  $region20: #{net_forward.1} parent=0 // pred_region
    _
  $region21: #{net_forward.1} parent=0 // pred_fallthru
    _
  // Predicated region
  $region22: #{net_forward.1} parent=0 // pred_check
    _
  $region23: #{net_forward.1} parent=0 // pred_check_branch
    %25 = sbr.rel (0) target = $region25
  $region24: #{net_forward.1} parent=0 // pred_region
    _
  $region25: #{net_forward.1} parent=0 // pred_fallthru
    _
  // Predicated region
  $region26: #{net_forward.1} parent=0 // pred_check
    _
  $region27: #{net_forward.1} parent=0 // pred_check_branch
    %27 = sbr.rel (0) target = $region29
  $region28: #{net_forward.1} parent=0 // pred_region
    _
  $region29: #{net_forward.1} parent=0 // pred_fallthru
    _
  // Predicated region
  $region30: #{net_forward.1} parent=0 // pred_check
    _
  $region31: #{net_forward.1} parent=0 // pred_check_branch
    %29 = sbr.rel (0) target = $region33
  $region32: #{net_forward.1} parent=0 // pred_region
    _
  $region33: #{net_forward.1} parent=0 // pred_fallthru
    _
  // Predicated region
  $region34: #{net_forward.1} parent=0 // pred_check
    _
  $region35: #{net_forward.1} parent=0 // pred_check_branch
    %31 = sbr.rel (0) target = $region37
  $region36: #{net_forward.1} parent=0 // pred_region
    _
  $region37: #{net_forward.1} parent=0 // pred_fallthru
    _
  %v33 = vld [vmem:[%s0] sm:$0xff]
  %v34 = vld [vmem:[%s0 + $0x8] sm:$0xff]
  %v35 = vld [vmem:[%s0 + $0x10] sm:$0xff]
  %v36 = vld [vmem:[%s0 + $0x18] sm:$0xff]
  %v37 = vld [vmem:[%s0 + $0x20] sm:$0xff]
  %v38 = vld [vmem:[%s0 + $0x28] sm:$0xff]
  %v39 = vld [vmem:[%s0 + $0x30] sm:$0xff]
  %v40 = vld [vmem:[%s0 + $0x38] sm:$0xff]
  %v41 = vld [vmem:[%s0 + $0x40] sm:$0xff]
  %v42 = vld [vmem:[%s0 + $0x48] sm:$0xff]
  %v43 = vld [vmem:[%s0 + $0x50] sm:$0xff]
  %v44 = vld [vmem:[%s0 + $0x58] sm:$0xff]
  %v45 = vld [vmem:[%s0 + $0x60] sm:$0xff]
  %v46 = vld [vmem:[%s0 + $0x68] sm:$0xff]
  %v47 = vld [vmem:[%s0 + $0x70] sm:$0xff]
  %v48 = vld [vmem:[%s0 + $0x78] sm:$0xff]
  %v49 = vld [vmem:[%s1] sm:$0xff]
  %v50 = vld [vmem:[%s1 + $0x8] sm:$0xff]
  %v51 = vld [vmem:[%s1 + $0x10] sm:$0xff]
  %v52 = vld [vmem:[%s1 + $0x18] sm:$0xff]
  %v53 = vld [vmem:[%s1 + $0x20] sm:$0xff]
  %v54 = vld [vmem:[%s1 + $0x28] sm:$0xff]
  %v55 = vld [vmem:[%s1 + $0x30] sm:$0xff]
  %v56 = vld [vmem:[%s1 + $0x38] sm:$0xff]
  %v57 = vld [vmem:[%s1 + $0x40] sm:$0xff]
  %v58 = vld [vmem:[%s1 + $0x48] sm:$0xff]
  %v59 = vld [vmem:[%s1 + $0x50] sm:$0xff]
  %v60 = vld [vmem:[%s1 + $0x58] sm:$0xff]
  %v61 = vld [vmem:[%s1 + $0x60] sm:$0xff]
  %v62 = vld [vmem:[%s1 + $0x68] sm:$0xff]
  %v63 = vld [vmem:[%s1 + $0x70] sm:$0xff]
  %v64 = vld [vmem:[%s1 + $0x78] sm:$0xff]
  %v65 = vld [vmem:[%s1 + $0x80] sm:$0xff]
  %v66 = vld [vmem:[%s1 + $0x88] sm:$0xff]
  %v67 = vld [vmem:[%s1 + $0x90] sm:$0xff]
  %v68 = vld [vmem:[%s1 + $0x98] sm:$0xff]
  %v69 = vld [vmem:[%s1 + $0xa0] sm:$0xff]
  %v70 = vld [vmem:[%s1 + $0xa8] sm:$0xff]
  %v71 = vld [vmem:[%s1 + $0xb0] sm:$0xff]
  %v72 = vld [vmem:[%s1 + $0xb8] sm:$0xff]
  %v73 = vld [vmem:[%s1 + $0xc0] sm:$0xff]
  %v74 = vld [vmem:[%s1 + $0xc8] sm:$0xff]
  %v75 = vld [vmem:[%s1 + $0xd0] sm:$0xff]
  %v76 = vld [vmem:[%s1 + $0xd8] sm:$0xff]
  %v77 = vld [vmem:[%s1 + $0xe0] sm:$0xff]
  %v78 = vld [vmem:[%s1 + $0xe8] sm:$0xff]
  %v79 = vld [vmem:[%s1 + $0xf0] sm:$0xff]
  %v80 = vld [vmem:[%s1 + $0xf8] sm:$0xff]
  %v81 = vld [vmem:[%s1 + $0x100] sm:$0xff]
  %v82 = vld [vmem:[%s1 + $0x108] sm:$0xff]
  %v83 = vld [vmem:[%s1 + $0x110] sm:$0xff]
  %v84 = vld [vmem:[%s1 + $0x118] sm:$0xff]
  %v85 = vld [vmem:[%s1 + $0x120] sm:$0xff]
  %v86 = vld [vmem:[%s1 + $0x128] sm:$0xff]
  %v87 = vld [vmem:[%s1 + $0x130] sm:$0xff]
  %v88 = vld [vmem:[%s1 + $0x138] sm:$0xff]
  %v89 = vld [vmem:[%s1 + $0x140] sm:$0xff]
  %v90 = vld [vmem:[%s1 + $0x148] sm:$0xff]
  %v107 = vunpack.c.l.b16 %v33
  %v108 = vunpack.c.h.b16 %v33
  %v109 = vunpack.c.l.b16 %v34
  %v110 = vunpack.c.h.b16 %v34
  %v111 = vunpack.c.l.b16 %v35
  %v112 = vunpack.c.h.b16 %v35
  %v113 = vunpack.c.l.b16 %v36
  %v114 = vunpack.c.h.b16 %v36
  %v115 = vunpack.c.l.b16 %v37
  %v116 = vunpack.c.h.b16 %v37
  %v117 = vunpack.c.l.b16 %v38
  %v118 = vunpack.c.h.b16 %v38
  %v119 = vunpack.c.l.b16 %v39
  %v120 = vunpack.c.h.b16 %v39
  %v121 = vunpack.c.l.b16 %v40
  %v122 = vunpack.c.h.b16 %v40
  %v123 = vunpack.c.l.b16 %v41
  %v124 = vunpack.c.h.b16 %v41
  %v125 = vunpack.c.l.b16 %v42
  %v126 = vunpack.c.h.b16 %v42
  %v127 = vunpack.c.l.b16 %v43
  %v128 = vunpack.c.h.b16 %v43
  %v129 = vunpack.c.l.b16 %v44
  %v130 = vunpack.c.h.b16 %v44
  %v131 = vunpack.c.l.b16 %v45
  %v132 = vunpack.c.h.b16 %v45
  %v133 = vunpack.c.l.b16 %v46
  %v134 = vunpack.c.h.b16 %v46
  %v135 = vunpack.c.l.b16 %v47
  %v136 = vunpack.c.h.b16 %v47
  %v137 = vunpack.c.l.b16 %v48
  %v138 = vunpack.c.h.b16 %v48
  %v139 = vpack.c.b16 %v109, %v107
  %v140 = vpack.c.b16 %v110, %v108
  %v141 = vpack.c.b16 %v113, %v111
  %v142 = vpack.c.b16 %v114, %v112
  %v143 = vpack.c.b16 %v117, %v115
  %v144 = vpack.c.b16 %v118, %v116
  %v145 = vpack.c.b16 %v121, %v119
  %v146 = vpack.c.b16 %v122, %v120
  %v147 = vpack.c.b16 %v125, %v123
  %v148 = vpack.c.b16 %v126, %v124
  %v149 = vpack.c.b16 %v129, %v127
  %v150 = vpack.c.b16 %v130, %v128
  %v151 = vpack.c.b16 %v133, %v131
  %v152 = vpack.c.b16 %v134, %v132
  %v153 = vpack.c.b16 %v137, %v135
  %v154 = vpack.c.b16 %v138, %v136
  %v205 = vunpack.c.l.b16 %v49
  %v206 = vunpack.c.h.b16 %v49
  %v207 = vunpack.c.l.b16 %v50
  %v208 = vunpack.c.h.b16 %v50
  %v209 = vunpack.c.l.b16 %v51
  %v210 = vunpack.c.h.b16 %v51
  %v211 = vunpack.c.l.b16 %v52
  %v212 = vunpack.c.h.b16 %v52
  %v213 = vunpack.c.l.b16 %v53
  %v214 = vunpack.c.h.b16 %v53
  %v215 = vunpack.c.l.b16 %v54
  %v216 = vunpack.c.h.b16 %v54
  %v217 = vunpack.c.l.b16 %v55
  %v218 = vunpack.c.h.b16 %v55
  %v219 = vunpack.c.l.b16 %v56
  %v220 = vunpack.c.h.b16 %v56
  %v221 = vunpack.c.l.b16 %v57
  %v222 = vunpack.c.h.b16 %v57
  %v223 = vunpack.c.l.b16 %v58
  %v224 = vunpack.c.h.b16 %v58
  %v225 = vunpack.c.l.b16 %v59
  %v226 = vunpack.c.h.b16 %v59
  %v227 = vunpack.c.l.b16 %v60
  %v228 = vunpack.c.h.b16 %v60
  %v229 = vunpack.c.l.b16 %v61
  %v230 = vunpack.c.h.b16 %v61
  %v231 = vunpack.c.l.b16 %v62
  %v232 = vunpack.c.h.b16 %v62
  %v233 = vunpack.c.l.b16 %v63
  %v234 = vunpack.c.h.b16 %v63
  %v235 = vunpack.c.l.b16 %v64
  %v236 = vunpack.c.h.b16 %v64
  %v237 = vunpack.c.l.b16 %v65
  %v238 = vunpack.c.h.b16 %v65
  %v239 = vunpack.c.l.b16 %v66
  %v240 = vunpack.c.h.b16 %v66
  %v241 = vunpack.c.l.b16 %v67
  %v242 = vunpack.c.h.b16 %v67
  %v243 = vunpack.c.l.b16 %v68
  %v244 = vunpack.c.h.b16 %v68
  %v245 = vunpack.c.l.b16 %v69
  %v246 = vunpack.c.h.b16 %v69
  %v247 = vunpack.c.l.b16 %v70
  %v248 = vunpack.c.h.b16 %v70
  %v249 = vunpack.c.l.b16 %v71
  %v250 = vunpack.c.h.b16 %v71
  %v251 = vunpack.c.l.b16 %v72
  %v252 = vunpack.c.h.b16 %v72
  %v253 = vunpack.c.l.b16 %v73
  %v254 = vunpack.c.h.b16 %v73
  %v255 = vunpack.c.l.b16 %v74
  %v256 = vunpack.c.h.b16 %v74
  %v257 = vunpack.c.l.b16 %v75
  %v258 = vunpack.c.h.b16 %v75
  %v259 = vunpack.c.l.b16 %v76
  %v260 = vunpack.c.h.b16 %v76
  %v261 = vunpack.c.l.b16 %v77
  %v262 = vunpack.c.h.b16 %v77
  %v263 = vunpack.c.l.b16 %v78
  %v264 = vunpack.c.h.b16 %v78
  %v265 = vunpack.c.l.b16 %v79
  %v266 = vunpack.c.h.b16 %v79
  %v267 = vunpack.c.l.b16 %v80
  %v268 = vunpack.c.h.b16 %v80
  %v269 = vunpack.c.l.b16 %v81
  %v270 = vunpack.c.h.b16 %v81
  %v271 = vunpack.c.l.b16 %v82
  %v272 = vunpack.c.h.b16 %v82
  %v273 = vunpack.c.l.b16 %v83
  %v274 = vunpack.c.h.b16 %v83
  %v275 = vunpack.c.l.b16 %v84
  %v276 = vunpack.c.h.b16 %v84
  %v277 = vunpack.c.l.b16 %v85
  %v278 = vunpack.c.h.b16 %v85
  %v279 = vunpack.c.l.b16 %v86
  %v280 = vunpack.c.h.b16 %v86
  %v281 = vunpack.c.l.b16 %v87
  %v282 = vunpack.c.h.b16 %v87
  %v283 = vunpack.c.l.b16 %v88
  %v284 = vunpack.c.h.b16 %v88
  %v285 = vunpack.c.l.b16 %v89
  %v286 = vunpack.c.h.b16 %v89
  %v287 = vunpack.c.l.b16 %v90
  %v288 = vunpack.c.h.b16 %v90
  %v289 = vpack.c.b16 %v209, %v205
  %v290 = vpack.c.b16 %v210, %v206
  %v291 = vpack.c.b16 %v211, %v207
  %v292 = vpack.c.b16 %v212, %v208
  %v293 = vpack.c.b16 %v217, %v213
  %v294 = vpack.c.b16 %v218, %v214
  %v295 = vpack.c.b16 %v219, %v215
  %v296 = vpack.c.b16 %v220, %v216
  %v297 = vpack.c.b16 %v225, %v221
  %v298 = vpack.c.b16 %v226, %v222
  %v299 = vpack.c.b16 %v227, %v223
  %v300 = vpack.c.b16 %v228, %v224
  %v301 = vpack.c.b16 %v233, %v229
  %v302 = vpack.c.b16 %v234, %v230
  %v303 = vpack.c.b16 %v235, %v231
  %v304 = vpack.c.b16 %v236, %v232
  %v305 = vpack.c.b16 %v241, %v237
  %v306 = vpack.c.b16 %v242, %v238
  %v307 = vpack.c.b16 %v243, %v239
  %v308 = vpack.c.b16 %v244, %v240
  %v309 = vpack.c.b16 %v249, %v245
  %v310 = vpack.c.b16 %v250, %v246
  %v311 = vpack.c.b16 %v251, %v247
  %v312 = vpack.c.b16 %v252, %v248
  %v313 = vpack.c.b16 %v257, %v253
  %v314 = vpack.c.b16 %v258, %v254
  %v315 = vpack.c.b16 %v259, %v255
  %v316 = vpack.c.b16 %v260, %v256
  %v317 = vpack.c.b16 %v265, %v261
  %v318 = vpack.c.b16 %v266, %v262
  %v319 = vpack.c.b16 %v267, %v263
  %v320 = vpack.c.b16 %v268, %v264
  %v321 = vpack.c.b16 %v273, %v269
  %v322 = vpack.c.b16 %v274, %v270
  %v323 = vpack.c.b16 %v275, %v271
  %v324 = vpack.c.b16 %v276, %v272
  %v325 = vpack.c.b16 %v281, %v277
  %v326 = vpack.c.b16 %v282, %v278
  %v327 = vpack.c.b16 %v283, %v279
  %v328 = vpack.c.b16 %v284, %v280
  %v329 = vpack.c.b16 %v285, %v285
  %v330 = vpack.c.b16 %v286, %v286
  %v331 = vpack.c.b16 %v287, %v287
  %v332 = vpack.c.b16 %v288, %v288
  %vm373 = vcmask 326656
  %v375 = vsel %vm373, %v140, 0
  %v378 = vsel %vm373, %v142, 0
  %v381 = vsel %vm373, %v144, 0
  %v384 = vsel %vm373, %v146, 0
  %v387 = vsel %vm373, %v148, 0
  %v390 = vsel %vm373, %v150, 0
  %v393 = vsel %vm373, %v152, 0
  %v396 = vsel %vm373, %v154, 0
  %vm398 = vcmask 1043456
  %v400 = vsel %vm398, %v329, 0
  %v403 = vsel %vm398, %v330, 0
  %v406 = vsel %vm398, %v331, 0
  %v409 = vsel %vm398, %v332, 0
  %411 = vmatprep.subr.bf16.mxu0 %v318
  %412 = vmatpush1.bf16.msra.mxu0 %v317
  %413 = vmatprep.subr.bf16.mxu0 %v314
  %414 = vmatpush1.bf16.msra.mxu0 %v313
  %415 = vmatprep.subr.bf16.mxu0 %v310
  %416 = vmatpush1.bf16.msra.mxu0 %v309
  %417 = vmatprep.subr.bf16.mxu0 %v306
  %418 = vmatpush1.bf16.msra.mxu0 %v305
  %419 = vmatprep.subr.bf16.mxu0 %v302
  %420 = vmatpush1.bf16.msra.mxu0 %v301
  %421 = vmatprep.subr.bf16.mxu0 %v298
  %422 = vmatpush1.bf16.msra.mxu0 %v297
  %423 = vmatprep.subr.bf16.mxu0 %v294
  %424 = vmatpush1.bf16.msra.mxu0 %v293
  %425 = vmatprep.subr.bf16.mxu0 %v290
  %426 = vmatpush1.bf16.msra.mxu0 %v289
  %427 = vmatprep.subr.bf16.mxu0 0
  %428 = vmatpush2.bf16.msra.mxu0 0
  %429 = vmatprep.subr.bf16.mxu0 0
  %430 = vmatpush2.bf16.msra.mxu0 0
  %431 = vmatprep.subr.bf16.mxu0 0
  %432 = vmatpush2.bf16.msra.mxu0 0
  %433 = vmatprep.subr.bf16.mxu0 0
  %434 = vmatpush2.bf16.msra.mxu0 0
  %435 = vmatprep.subr.bf16.mxu0 0
  %436 = vmatpush2.bf16.msra.mxu0 0
  %437 = vmatprep.subr.bf16.mxu0 %v403
  %438 = vmatpush2.bf16.msra.mxu0 %v400
  %439 = vmatprep.subr.bf16.mxu0 %v326
  %440 = vmatpush2.bf16.msra.mxu0 %v325
  %441 = vmatprep.subr.bf16.mxu0 %v322
  %442 = vmatpush2.bf16.msra.mxu0 %v321
  %443 = vmatprep.mubr.bf16.mxu0 %v375
  %444 = vmatmul.mubr.bf16.gmra.mxu0 %v139
  %v445 = vpop.f32.mrf.mxu0
  %v446 = vadd.f32 0.0, %v445
  %v447 = vpop.f32.mrf.mxu0
  %v448 = vadd.f32 0.0, %v447
  %v449 = vpop.f32.mrf.mxu0
  %v450 = vadd.f32 0.0, %v449
  %v451 = vpop.f32.mrf.mxu0
  %v452 = vadd.f32 0.0, %v451
  %453 = vmatprep.mubr.bf16.mxu0 %v378
  %454 = vmatmul.mubr.bf16.gmra.mxu0 %v141
  %v455 = vpop.f32.mrf.mxu0
  %v456 = vadd.f32 0.0, %v455
  %v457 = vpop.f32.mrf.mxu0
  %v458 = vadd.f32 0.0, %v457
  %v459 = vpop.f32.mrf.mxu0
  %v460 = vadd.f32 0.0, %v459
  %v461 = vpop.f32.mrf.mxu0
  %v462 = vadd.f32 0.0, %v461
  %463 = vmatprep.mubr.bf16.mxu0 %v381
  %464 = vmatmul.mubr.bf16.gmra.mxu0 %v143
  %v465 = vpop.f32.mrf.mxu0
  %v466 = vadd.f32 0.0, %v465
  %v467 = vpop.f32.mrf.mxu0
  %v468 = vadd.f32 0.0, %v467
  %v469 = vpop.f32.mrf.mxu0
  %v470 = vadd.f32 0.0, %v469
  %v471 = vpop.f32.mrf.mxu0
  %v472 = vadd.f32 0.0, %v471
  %473 = vmatprep.mubr.bf16.mxu0 %v384
  %474 = vmatmul.mubr.bf16.gmra.mxu0 %v145
  %v475 = vpop.f32.mrf.mxu0
  %v476 = vadd.f32 0.0, %v475
  %v477 = vpop.f32.mrf.mxu0
  %v478 = vadd.f32 0.0, %v477
  %v479 = vpop.f32.mrf.mxu0
  %v480 = vadd.f32 0.0, %v479
  %v481 = vpop.f32.mrf.mxu0
  %v482 = vadd.f32 0.0, %v481
  %483 = vmatprep.mubr.bf16.mxu0 %v387
  %484 = vmatmul.mubr.bf16.gmra.mxu0 %v147
  %v485 = vpop.f32.mrf.mxu0
  %v486 = vadd.f32 0.0, %v485
  %v487 = vpop.f32.mrf.mxu0
  %v488 = vadd.f32 0.0, %v487
  %v489 = vpop.f32.mrf.mxu0
  %v490 = vadd.f32 0.0, %v489
  %v491 = vpop.f32.mrf.mxu0
  %v492 = vadd.f32 0.0, %v491
  %493 = vmatprep.mubr.bf16.mxu0 %v390
  %494 = vmatmul.mubr.bf16.gmra.mxu0 %v149
  %v495 = vpop.f32.mrf.mxu0
  %v496 = vadd.f32 0.0, %v495
  %v497 = vpop.f32.mrf.mxu0
  %v498 = vadd.f32 0.0, %v497
  %v499 = vpop.f32.mrf.mxu0
  %v500 = vadd.f32 0.0, %v499
  %v501 = vpop.f32.mrf.mxu0
  %v502 = vadd.f32 0.0, %v501
  %503 = vmatprep.mubr.bf16.mxu0 %v393
  %504 = vmatmul.mubr.bf16.gmra.mxu0 %v151
  %v505 = vpop.f32.mrf.mxu0
  %v506 = vadd.f32 0.0, %v505
  %v507 = vpop.f32.mrf.mxu0
  %v508 = vadd.f32 0.0, %v507
  %v509 = vpop.f32.mrf.mxu0
  %v510 = vadd.f32 0.0, %v509
  %v511 = vpop.f32.mrf.mxu0
  %v512 = vadd.f32 0.0, %v511
  %513 = vmatprep.mubr.bf16.mxu0 %v396
  %514 = vmatmul.mubr.bf16.gmra.mxu0 %v153
  %v515 = vpop.f32.mrf.mxu0
  %v516 = vadd.f32 0.0, %v515
  %v517 = vpop.f32.mrf.mxu0
  %v518 = vadd.f32 0.0, %v517
  %v519 = vpop.f32.mrf.mxu0
  %v520 = vadd.f32 0.0, %v519
  %v521 = vpop.f32.mrf.mxu0
  %v522 = vadd.f32 0.0, %v521
  %523 = vdwg.mxu0
  %524 = vmatprep.subr.bf16.mxu0 %v320
  %525 = vmatpush1.bf16.msra.mxu0 %v319
  %526 = vmatprep.subr.bf16.mxu0 %v316
  %527 = vmatpush1.bf16.msra.mxu0 %v315
  %528 = vmatprep.subr.bf16.mxu0 %v312
  %529 = vmatpush1.bf16.msra.mxu0 %v311
  %530 = vmatprep.subr.bf16.mxu0 %v308
  %531 = vmatpush1.bf16.msra.mxu0 %v307
  %532 = vmatprep.subr.bf16.mxu0 %v304
  %533 = vmatpush1.bf16.msra.mxu0 %v303
  %534 = vmatprep.subr.bf16.mxu0 %v300
  %535 = vmatpush1.bf16.msra.mxu0 %v299
  %536 = vmatprep.subr.bf16.mxu0 %v296
  %537 = vmatpush1.bf16.msra.mxu0 %v295
  %538 = vmatprep.subr.bf16.mxu0 %v292
  %539 = vmatpush1.bf16.msra.mxu0 %v291
  %540 = vmatprep.subr.bf16.mxu0 0
  %541 = vmatpush2.bf16.msra.mxu0 0
  %542 = vmatprep.subr.bf16.mxu0 0
  %543 = vmatpush2.bf16.msra.mxu0 0
  %544 = vmatprep.subr.bf16.mxu0 0
  %545 = vmatpush2.bf16.msra.mxu0 0
  %546 = vmatprep.subr.bf16.mxu0 0
  %547 = vmatpush2.bf16.msra.mxu0 0
  %548 = vmatprep.subr.bf16.mxu0 0
  %549 = vmatpush2.bf16.msra.mxu0 0
  %550 = vmatprep.subr.bf16.mxu0 %v409
  %551 = vmatpush2.bf16.msra.mxu0 %v406
  %552 = vmatprep.subr.bf16.mxu0 %v328
  %553 = vmatpush2.bf16.msra.mxu0 %v327
  %554 = vmatprep.subr.bf16.mxu0 %v324
  %555 = vmatpush2.bf16.msra.mxu0 %v323
  %556 = vmatprep.mubr.bf16.mxu0 %v375
  %557 = vmatmul.mubr.bf16.gmra.mxu0 %v139
  %v558 = vpop.f32.mrf.mxu0
  %v559 = vadd.f32 0.0, %v558
  %v560 = vpop.f32.mrf.mxu0
  %v561 = vadd.f32 0.0, %v560
  %v562 = vpop.f32.mrf.mxu0
  %v563 = vadd.f32 0.0, %v562
  %v564 = vpop.f32.mrf.mxu0
  %v565 = vadd.f32 0.0, %v564
  %566 = vmatprep.mubr.bf16.mxu0 %v378
  %567 = vmatmul.mubr.bf16.gmra.mxu0 %v141
  %v568 = vpop.f32.mrf.mxu0
  %v569 = vadd.f32 0.0, %v568
  %v570 = vpop.f32.mrf.mxu0
  %v571 = vadd.f32 0.0, %v570
  %v572 = vpop.f32.mrf.mxu0
  %v573 = vadd.f32 0.0, %v572
  %v574 = vpop.f32.mrf.mxu0
  %v575 = vadd.f32 0.0, %v574
  %576 = vmatprep.mubr.bf16.mxu0 %v381
  %577 = vmatmul.mubr.bf16.gmra.mxu0 %v143
  %v578 = vpop.f32.mrf.mxu0
  %v579 = vadd.f32 0.0, %v578
  %v580 = vpop.f32.mrf.mxu0
  %v581 = vadd.f32 0.0, %v580
  %v582 = vpop.f32.mrf.mxu0
  %v583 = vadd.f32 0.0, %v582
  %v584 = vpop.f32.mrf.mxu0
  %v585 = vadd.f32 0.0, %v584
  %586 = vmatprep.mubr.bf16.mxu0 %v384
  %587 = vmatmul.mubr.bf16.gmra.mxu0 %v145
  %v588 = vpop.f32.mrf.mxu0
  %v589 = vadd.f32 0.0, %v588
  %v590 = vpop.f32.mrf.mxu0
  %v591 = vadd.f32 0.0, %v590
  %v592 = vpop.f32.mrf.mxu0
  %v593 = vadd.f32 0.0, %v592
  %v594 = vpop.f32.mrf.mxu0
  %v595 = vadd.f32 0.0, %v594
  %596 = vmatprep.mubr.bf16.mxu0 %v387
  %597 = vmatmul.mubr.bf16.gmra.mxu0 %v147
  %v598 = vpop.f32.mrf.mxu0
  %v599 = vadd.f32 0.0, %v598
  %v600 = vpop.f32.mrf.mxu0
  %v601 = vadd.f32 0.0, %v600
  %v602 = vpop.f32.mrf.mxu0
  %v603 = vadd.f32 0.0, %v602
  %v604 = vpop.f32.mrf.mxu0
  %v605 = vadd.f32 0.0, %v604
  %606 = vmatprep.mubr.bf16.mxu0 %v390
  %607 = vmatmul.mubr.bf16.gmra.mxu0 %v149
  %v608 = vpop.f32.mrf.mxu0
  %v609 = vadd.f32 0.0, %v608
  %v610 = vpop.f32.mrf.mxu0
  %v611 = vadd.f32 0.0, %v610
  %v612 = vpop.f32.mrf.mxu0
  %v613 = vadd.f32 0.0, %v612
  %v614 = vpop.f32.mrf.mxu0
  %v615 = vadd.f32 0.0, %v614
  %616 = vmatprep.mubr.bf16.mxu0 %v393
  %617 = vmatmul.mubr.bf16.gmra.mxu0 %v151
  %v618 = vpop.f32.mrf.mxu0
  %v619 = vadd.f32 0.0, %v618
  %v620 = vpop.f32.mrf.mxu0
  %v621 = vadd.f32 0.0, %v620
  %v622 = vpop.f32.mrf.mxu0
  %v623 = vadd.f32 0.0, %v622
  %v624 = vpop.f32.mrf.mxu0
  %v625 = vadd.f32 0.0, %v624
  %626 = vmatprep.mubr.bf16.mxu0 %v396
  %627 = vmatmul.mubr.bf16.gmra.mxu0 %v153
  %v628 = vpop.f32.mrf.mxu0
  %v629 = vadd.f32 0.0, %v628
  %v630 = vpop.f32.mrf.mxu0
  %v631 = vadd.f32 0.0, %v630
  %v632 = vpop.f32.mrf.mxu0
  %v633 = vadd.f32 0.0, %v632
  %v634 = vpop.f32.mrf.mxu0
  %v635 = vadd.f32 0.0, %v634
  %636 = vdwg.mxu0
  %v637 = vmax.f32 %v446, %v448
  %v638 = vmax.f32 %v450, %v452
  %v639 = vmax.f32 %v456, %v458
  %v640 = vmax.f32 %v460, %v462
  %v641 = vmax.f32 %v466, %v468
  %v642 = vmax.f32 %v470, %v472
  %v643 = vmax.f32 %v476, %v478
  %v644 = vmax.f32 %v480, %v482
  %v645 = vmax.f32 %v486, %v488
  %v646 = vmax.f32 %v490, %v492
  %v647 = vmax.f32 %v496, %v498
  %v648 = vmax.f32 %v500, %v502
  %v649 = vmax.f32 %v506, %v508
  %v650 = vmax.f32 %v510, %v512
  %v651 = vmax.f32 %v516, %v518
  %v652 = vmax.f32 %v520, %v522
  %v653 = vmax.f32 %v559, %v561
  %v654 = vmax.f32 %v563, %v565
  %v655 = vmax.f32 %v569, %v571
  %v656 = vmax.f32 %v573, %v575
  %v657 = vmax.f32 %v579, %v581
  %v658 = vmax.f32 %v583, %v585
  %v659 = vmax.f32 %v589, %v591
  %v660 = vmax.f32 %v593, %v595
  %v661 = vmax.f32 %v599, %v601
  %v662 = vmax.f32 %v603, %v605
  %v663 = vmax.f32 %v609, %v611
  %v664 = vmax.f32 %v613, %v615
  %v665 = vmax.f32 %v619, %v621
  %v666 = vmax.f32 %v623, %v625
  %v667 = vmax.f32 %v629, %v631
  %v668 = vmax.f32 %v633, %v635
  %v669 = vmax.f32 %v637, %v653
  %v670 = vmax.f32 %v638, %v654
  %v671 = vmax.f32 %v639, %v655
  %v672 = vmax.f32 %v640, %v656
  %v673 = vmax.f32 %v641, %v657
  %v674 = vmax.f32 %v642, %v658
  %v675 = vmax.f32 %v643, %v659
  %v676 = vmax.f32 %v644, %v660
  %v677 = vmax.f32 %v645, %v661
  %v678 = vmax.f32 %v646, %v662
  %v679 = vmax.f32 %v647, %v663
  %v680 = vmax.f32 %v648, %v664
  %v681 = vmax.f32 %v649, %v665
  %v682 = vmax.f32 %v650, %v666
  %v683 = vmax.f32 %v651, %v667
  %v684 = vmax.f32 %v652, %v668
  %v685 = vld [vmem:[%s2] sm:$0x1]
  %v687 = vlaneseq
  %v688 = vshrl.u32 %v687, 7
  %v689 = vsub.s32 0, %v688
  %v690 = vrot.slane %v685, %v689
  %v692 = vadd.f32 %v669, %v690
  %v693 = vadd.f32 %v670, %v690
  %v694 = vadd.f32 %v671, %v690
  %v695 = vadd.f32 %v672, %v690
  %v696 = vadd.f32 %v673, %v690
  %v697 = vadd.f32 %v674, %v690
  %v698 = vadd.f32 %v675, %v690
  %v699 = vadd.f32 %v676, %v690
  %v700 = vadd.f32 %v677, %v690
  %v701 = vadd.f32 %v678, %v690
  %v702 = vadd.f32 %v679, %v690
  %v703 = vadd.f32 %v680, %v690
  %v704 = vadd.f32 %v681, %v690
  %v705 = vadd.f32 %v682, %v690
  %v706 = vadd.f32 %v683, %v690
  %v707 = vadd.f32 %v684, %v690
  %v708 = vmax.f32 %v692, 0.0
  %v709 = vmax.f32 %v693, 0.0
  %v710 = vmax.f32 %v694, 0.0
  %v711 = vmax.f32 %v695, 0.0
  %v712 = vmax.f32 %v696, 0.0
  %v713 = vmax.f32 %v697, 0.0
  %v714 = vmax.f32 %v698, 0.0
  %v715 = vmax.f32 %v699, 0.0
  %v716 = vmax.f32 %v700, 0.0
  %v717 = vmax.f32 %v701, 0.0
  %v718 = vmax.f32 %v702, 0.0
  %v719 = vmax.f32 %v703, 0.0
  %v720 = vmax.f32 %v704, 0.0
  %v721 = vmax.f32 %v705, 0.0
  %v722 = vmax.f32 %v706, 0.0
  %v723 = vmax.f32 %v707, 0.0
  %vm740 = vcmask 1041408
  %v741 = vrot.slane %v708, 6
  %v742 = vrot.slane %v709, 6
  %v743 = vsel %vm740, %v741, %v742
  %v744 = vrot.slane %v710, 6
  %v745 = vrot.slane %v711, 6
  %v746 = vsel %vm740, %v744, %v745
  %v747 = vrot.slane %v712, 6
  %v748 = vrot.slane %v713, 6
  %v749 = vsel %vm740, %v747, %v748
  %v750 = vrot.slane %v714, 6
  %v751 = vrot.slane %v715, 6
  %v752 = vsel %vm740, %v750, %v751
  %v753 = vrot.slane %v716, 6
  %v754 = vrot.slane %v717, 6
  %v755 = vsel %vm740, %v753, %v754
  %v756 = vrot.slane %v718, 6
  %v757 = vrot.slane %v719, 6
  %v758 = vsel %vm740, %v756, %v757
  %v759 = vrot.slane %v720, 6
  %v760 = vrot.slane %v721, 6
  %v761 = vsel %vm740, %v759, %v760
  %v762 = vrot.slane %v722, 6
  %v763 = vrot.slane %v723, 6
  %v764 = vsel %vm740, %v762, %v763
  %vm773 = vcmask 1046528
  %v774 = vrot.slane %v708, 1
  %v775 = vrot.slane %v709, 1
  %v776 = vsel %vm773, %v774, %v775
  %v777 = vrot.slane %v710, 1
  %v778 = vrot.slane %v711, 1
  %v779 = vsel %vm773, %v777, %v778
  %v780 = vrot.slane %v712, 1
  %v781 = vrot.slane %v713, 1
  %v782 = vsel %vm773, %v780, %v781
  %v783 = vrot.slane %v714, 1
  %v784 = vrot.slane %v715, 1
  %v785 = vsel %vm773, %v783, %v784
  %v786 = vrot.slane %v716, 1
  %v787 = vrot.slane %v717, 1
  %v788 = vsel %vm773, %v786, %v787
  %v789 = vrot.slane %v718, 1
  %v790 = vrot.slane %v719, 1
  %v791 = vsel %vm773, %v789, %v790
  %v792 = vrot.slane %v720, 1
  %v793 = vrot.slane %v721, 1
  %v794 = vsel %vm773, %v792, %v793
  %v795 = vrot.slane %v722, 1
  %v796 = vrot.slane %v723, 1
  %v797 = vsel %vm773, %v795, %v796
  %vm806 = vcmask 1040384
  %v807 = vrot.slane %v708, 7
  %v808 = vrot.slane %v709, 7
  %v809 = vsel %vm806, %v807, %v808
  %v810 = vrot.slane %v710, 7
  %v811 = vrot.slane %v711, 7
  %v812 = vsel %vm806, %v810, %v811
  %v813 = vrot.slane %v712, 7
  %v814 = vrot.slane %v713, 7
  %v815 = vsel %vm806, %v813, %v814
  %v816 = vrot.slane %v714, 7
  %v817 = vrot.slane %v715, 7
  %v818 = vsel %vm806, %v816, %v817
  %v819 = vrot.slane %v716, 7
  %v820 = vrot.slane %v717, 7
  %v821 = vsel %vm806, %v819, %v820
  %v822 = vrot.slane %v718, 7
  %v823 = vrot.slane %v719, 7
  %v824 = vsel %vm806, %v822, %v823
  %v825 = vrot.slane %v720, 7
  %v826 = vrot.slane %v721, 7
  %v827 = vsel %vm806, %v825, %v826
  %v828 = vrot.slane %v722, 7
  %v829 = vrot.slane %v723, 7
  %v830 = vsel %vm806, %v828, %v829
  %vm839 = vcmask 1045504
  %v840 = vrot.slane %v708, 2
  %v841 = vrot.slane %v709, 2
  %v842 = vsel %vm839, %v840, %v841
  %v843 = vrot.slane %v710, 2
  %v844 = vrot.slane %v711, 2
  %v845 = vsel %vm839, %v843, %v844
  %v846 = vrot.slane %v712, 2
  %v847 = vrot.slane %v713, 2
  %v848 = vsel %vm839, %v846, %v847
  %v849 = vrot.slane %v714, 2
  %v850 = vrot.slane %v715, 2
  %v851 = vsel %vm839, %v849, %v850
  %v852 = vrot.slane %v716, 2
  %v853 = vrot.slane %v717, 2
  %v854 = vsel %vm839, %v852, %v853
  %v855 = vrot.slane %v718, 2
  %v856 = vrot.slane %v719, 2
  %v857 = vsel %vm839, %v855, %v856
  %v858 = vrot.slane %v720, 2
  %v859 = vrot.slane %v721, 2
  %v860 = vsel %vm839, %v858, %v859
  %v861 = vrot.slane %v722, 2
  %v862 = vrot.slane %v723, 2
  %v863 = vsel %vm839, %v861, %v862
  %v872 = vpack.c.bf16 %v710, %v708
  %v873 = vpack.c.bf16 %v746, %v743
  %v874 = vpack.c.bf16 %v779, %v776
  %v875 = vpack.c.bf16 %v812, %v809
  %v876 = vpack.c.bf16 %v845, %v842
  %v877 = vpack.c.bf16 %v711, %v709
  %v878 = vpack.c.bf16 %v714, %v712
  %v879 = vpack.c.bf16 %v752, %v749
  %v880 = vpack.c.bf16 %v785, %v782
  %v881 = vpack.c.bf16 %v818, %v815
  %v882 = vpack.c.bf16 %v851, %v848
  %v883 = vpack.c.bf16 %v715, %v713
  %v884 = vpack.c.bf16 %v718, %v716
  %v885 = vpack.c.bf16 %v758, %v755
  %v886 = vpack.c.bf16 %v791, %v788
  %v887 = vpack.c.bf16 %v824, %v821
  %v888 = vpack.c.bf16 %v857, %v854
  %v889 = vpack.c.bf16 %v719, %v717
  %v890 = vpack.c.bf16 %v722, %v720
  %v891 = vpack.c.bf16 %v764, %v761
  %v892 = vpack.c.bf16 %v797, %v794
  %v893 = vpack.c.bf16 %v830, %v827
  %v894 = vpack.c.bf16 %v863, %v860
  %v895 = vpack.c.bf16 %v723, %v721
  %v896 = vld [vmem:[%s3] sm:$0xff]
  %v897 = vld [vmem:[%s3 + $0x8] sm:$0xff]
  %v898 = vld [vmem:[%s3 + $0x10] sm:$0xff]
  %v899 = vld [vmem:[%s3 + $0x18] sm:$0xff]
  %v900 = vld [vmem:[%s3 + $0x20] sm:$0xff]
  %v901 = vld [vmem:[%s3 + $0x28] sm:$0xff]
  %v902 = vld [vmem:[%s3 + $0x30] sm:$0xff]
  %v903 = vld [vmem:[%s3 + $0x38] sm:$0xff]
  %v904 = vld [vmem:[%s3 + $0x40] sm:$0xff]
  %v905 = vld [vmem:[%s3 + $0x48] sm:$0xff]
  %v906 = vld [vmem:[%s3 + $0x50] sm:$0xff]
  %v907 = vld [vmem:[%s3 + $0x58] sm:$0xff]
  %v908 = vld [vmem:[%s3 + $0x60] sm:$0xff]
  %v909 = vld [vmem:[%s3 + $0x68] sm:$0xff]
  %v910 = vld [vmem:[%s3 + $0x70] sm:$0xff]
  %v911 = vld [vmem:[%s3 + $0x78] sm:$0xff]
  %v912 = vld [vmem:[%s3 + $0x80] sm:$0xff]
  %v913 = vld [vmem:[%s3 + $0x88] sm:$0xff]
  %v914 = vld [vmem:[%s3 + $0x90] sm:$0xff]
  %v915 = vld [vmem:[%s3 + $0x98] sm:$0xff]
  %v916 = vld [vmem:[%s3 + $0xa0] sm:$0xff]
  %v917 = vld [vmem:[%s3 + $0xa8] sm:$0xff]
  %v918 = vld [vmem:[%s3 + $0xb0] sm:$0xff]
  %v919 = vld [vmem:[%s3 + $0xb8] sm:$0xff]
  %v920 = vld [vmem:[%s3 + $0xc0] sm:$0xff]
  %v921 = vld [vmem:[%s3 + $0xc8] sm:$0xff]
  %v922 = vld [vmem:[%s3 + $0xd0] sm:$0xff]
  %v923 = vld [vmem:[%s3 + $0xd8] sm:$0xff]
  %v924 = vld [vmem:[%s3 + $0xe0] sm:$0xff]
  %v925 = vld [vmem:[%s3 + $0xe8] sm:$0xff]
  %v926 = vld [vmem:[%s3 + $0xf0] sm:$0xff]
  %v927 = vld [vmem:[%s3 + $0xf8] sm:$0xff]
  %v928 = vld [vmem:[%s3 + $0x100] sm:$0xff]
  %v929 = vld [vmem:[%s3 + $0x108] sm:$0xff]
  %v930 = vld [vmem:[%s3 + $0x110] sm:$0xff]
  %v931 = vld [vmem:[%s3 + $0x118] sm:$0xff]
  %v932 = vld [vmem:[%s3 + $0x120] sm:$0xff]
  %v933 = vld [vmem:[%s3 + $0x128] sm:$0xff]
  %v934 = vld [vmem:[%s3 + $0x130] sm:$0xff]
  %v935 = vld [vmem:[%s3 + $0x138] sm:$0xff]
  %v936 = vld [vmem:[%s3 + $0x140] sm:$0xff]
  %v937 = vld [vmem:[%s3 + $0x148] sm:$0xff]
  %v938 = vld [vmem:[%s3 + $0x150] sm:$0xff]
  %v939 = vld [vmem:[%s3 + $0x158] sm:$0xff]
  %v940 = vld [vmem:[%s3 + $0x160] sm:$0xff]
  %v941 = vld [vmem:[%s3 + $0x168] sm:$0xff]
  %v942 = vld [vmem:[%s3 + $0x170] sm:$0xff]
  %v943 = vld [vmem:[%s3 + $0x178] sm:$0xff]
  %v944 = vld [vmem:[%s3 + $0x180] sm:$0xff]
  %v945 = vld [vmem:[%s3 + $0x188] sm:$0xff]
  %v946 = vld [vmem:[%s3 + $0x190] sm:$0xff]
  %v947 = vld [vmem:[%s3 + $0x198] sm:$0xff]
  %v948 = vld [vmem:[%s3 + $0x1a0] sm:$0xff]
  %v949 = vld [vmem:[%s3 + $0x1a8] sm:$0xff]
  %v950 = vld [vmem:[%s3 + $0x1b0] sm:$0xff]
  %v951 = vld [vmem:[%s3 + $0x1b8] sm:$0xff]
  %v952 = vld [vmem:[%s3 + $0x1c0] sm:$0xff]
  %v953 = vld [vmem:[%s3 + $0x1c8] sm:$0xff]
  %v954 = vld [vmem:[%s3 + $0x1d0] sm:$0xff]
  %v955 = vld [vmem:[%s3 + $0x1d8] sm:$0xff]
  %v956 = vld [vmem:[%s3 + $0x1e0] sm:$0xff]
  %v957 = vld [vmem:[%s3 + $0x1e8] sm:$0xff]
  %v958 = vld [vmem:[%s3 + $0x1f0] sm:$0xff]
  %v959 = vld [vmem:[%s3 + $0x1f8] sm:$0xff]
  %v960 = vld [vmem:[%s3 + $0x200] sm:$0xff]
  %v961 = vld [vmem:[%s3 + $0x208] sm:$0xff]
  %v962 = vld [vmem:[%s3 + $0x210] sm:$0xff]
  %v963 = vld [vmem:[%s3 + $0x218] sm:$0xff]
  %v964 = vld [vmem:[%s3 + $0x220] sm:$0xff]
  %v965 = vld [vmem:[%s3 + $0x228] sm:$0xff]
  %v966 = vld [vmem:[%s3 + $0x230] sm:$0xff]
  %v967 = vld [vmem:[%s3 + $0x238] sm:$0xff]
  %v968 = vld [vmem:[%s3 + $0x240] sm:$0xff]
  %v969 = vld [vmem:[%s3 + $0x248] sm:$0xff]
  %v970 = vld [vmem:[%s3 + $0x250] sm:$0xff]
  %v971 = vld [vmem:[%s3 + $0x258] sm:$0xff]
  %v972 = vld [vmem:[%s3 + $0x260] sm:$0xff]
  %v973 = vld [vmem:[%s3 + $0x268] sm:$0xff]
  %v974 = vld [vmem:[%s3 + $0x270] sm:$0xff]
  %v975 = vld [vmem:[%s3 + $0x278] sm:$0xff]
  %v976 = vld [vmem:[%s3 + $0x280] sm:$0xff]
  %v977 = vld [vmem:[%s3 + $0x288] sm:$0xff]
  %v978 = vld [vmem:[%s3 + $0x290] sm:$0xff]
  %v979 = vld [vmem:[%s3 + $0x298] sm:$0xff]
  %v980 = vld [vmem:[%s3 + $0x2a0] sm:$0xff]
  %v981 = vld [vmem:[%s3 + $0x2a8] sm:$0xff]
  %v982 = vld [vmem:[%s3 + $0x2b0] sm:$0xff]
  %v983 = vld [vmem:[%s3 + $0x2b8] sm:$0xff]
  %v984 = vld [vmem:[%s3 + $0x2c0] sm:$0xff]
  %v985 = vld [vmem:[%s3 + $0x2c8] sm:$0xff]
  %v986 = vld [vmem:[%s3 + $0x2d0] sm:$0xff]
  %v987 = vld [vmem:[%s3 + $0x2d8] sm:$0xff]
  %v988 = vld [vmem:[%s3 + $0x2e0] sm:$0xff]
  %v989 = vld [vmem:[%s3 + $0x2e8] sm:$0xff]
  %v990 = vld [vmem:[%s3 + $0x2f0] sm:$0xff]
  %v991 = vld [vmem:[%s3 + $0x2f8] sm:$0xff]
  %v992 = vld [vmem:[%s3 + $0x300] sm:$0xff]
  %v993 = vld [vmem:[%s3 + $0x308] sm:$0xff]
  %v994 = vld [vmem:[%s3 + $0x310] sm:$0xff]
  %v995 = vld [vmem:[%s3 + $0x318] sm:$0xff]
  %v996 = vld [vmem:[%s3 + $0x320] sm:$0xff]
  %v997 = vld [vmem:[%s3 + $0x328] sm:$0xff]
  %v998 = vld [vmem:[%s3 + $0x330] sm:$0xff]
  %v999 = vld [vmem:[%s3 + $0x338] sm:$0xff]
  %v1000 = vld [vmem:[%s3 + $0x340] sm:$0xff]
  %v1001 = vld [vmem:[%s3 + $0x348] sm:$0xff]
  %v1002 = vld [vmem:[%s3 + $0x350] sm:$0xff]
  %v1003 = vld [vmem:[%s3 + $0x358] sm:$0xff]
  %v1004 = vld [vmem:[%s3 + $0x360] sm:$0xff]
  %v1005 = vld [vmem:[%s3 + $0x368] sm:$0xff]
  %v1006 = vld [vmem:[%s3 + $0x370] sm:$0xff]
  %v1007 = vld [vmem:[%s3 + $0x378] sm:$0xff]
  %v1008 = vld [vmem:[%s3 + $0x380] sm:$0xff]
  %v1009 = vld [vmem:[%s3 + $0x388] sm:$0xff]
  %v1010 = vld [vmem:[%s3 + $0x390] sm:$0xff]
  %v1011 = vld [vmem:[%s3 + $0x398] sm:$0xff]
  %v1012 = vld [vmem:[%s3 + $0x3a0] sm:$0xff]
  %v1013 = vld [vmem:[%s3 + $0x3a8] sm:$0xff]
  %v1014 = vld [vmem:[%s3 + $0x3b0] sm:$0xff]
  %v1015 = vld [vmem:[%s3 + $0x3b8] sm:$0xff]
  %v1016 = vld [vmem:[%s3 + $0x3c0] sm:$0xff]
  %v1017 = vld [vmem:[%s3 + $0x3c8] sm:$0xff]
  %v1018 = vld [vmem:[%s3 + $0x3d0] sm:$0xff]
  %v1019 = vld [vmem:[%s3 + $0x3d8] sm:$0xff]
  %v1020 = vld [vmem:[%s3 + $0x3e0] sm:$0xff]
  %v1021 = vld [vmem:[%s3 + $0x3e8] sm:$0xff]
  %v1022 = vld [vmem:[%s3 + $0x3f0] sm:$0xff]
  %v1023 = vld [vmem:[%s3 + $0x3f8] sm:$0xff]
  %v1024 = vld [vmem:[%s3 + $0x400] sm:$0xff]
  %v1025 = vld [vmem:[%s3 + $0x408] sm:$0xff]
  %v1026 = vld [vmem:[%s3 + $0x410] sm:$0xff]
  %v1027 = vld [vmem:[%s3 + $0x418] sm:$0xff]
  %v1028 = vld [vmem:[%s3 + $0x420] sm:$0xff]
  %v1029 = vld [vmem:[%s3 + $0x428] sm:$0xff]
  %v1030 = vld [vmem:[%s3 + $0x430] sm:$0xff]
  %v1031 = vld [vmem:[%s3 + $0x438] sm:$0xff]
  %v1032 = vld [vmem:[%s3 + $0x440] sm:$0xff]
  %v1033 = vld [vmem:[%s3 + $0x448] sm:$0xff]
  %v1034 = vld [vmem:[%s3 + $0x450] sm:$0xff]
  %v1035 = vld [vmem:[%s3 + $0x458] sm:$0xff]
  %v1036 = vld [vmem:[%s3 + $0x460] sm:$0xff]
  %v1037 = vld [vmem:[%s3 + $0x468] sm:$0xff]
  %v1038 = vld [vmem:[%s3 + $0x470] sm:$0xff]
  %v1039 = vld [vmem:[%s3 + $0x478] sm:$0xff]
  %v1040 = vld [vmem:[%s3 + $0x480] sm:$0xff]
  %v1041 = vld [vmem:[%s3 + $0x488] sm:$0xff]
  %v1042 = vld [vmem:[%s3 + $0x490] sm:$0xff]
  %v1043 = vld [vmem:[%s3 + $0x498] sm:$0xff]
  %v1044 = vld [vmem:[%s3 + $0x4a0] sm:$0xff]
  %v1045 = vld [vmem:[%s3 + $0x4a8] sm:$0xff]
  %v1046 = vld [vmem:[%s3 + $0x4b0] sm:$0xff]
  %v1047 = vld [vmem:[%s3 + $0x4b8] sm:$0xff]
  %v1048 = vld [vmem:[%s3 + $0x4c0] sm:$0xff]
  %v1049 = vld [vmem:[%s3 + $0x4c8] sm:$0xff]
  %v1050 = vld [vmem:[%s3 + $0x4d0] sm:$0xff]
  %v1051 = vld [vmem:[%s3 + $0x4d8] sm:$0xff]
  %v1052 = vld [vmem:[%s3 + $0x4e0] sm:$0xff]
  %v1053 = vld [vmem:[%s3 + $0x4e8] sm:$0xff]
  %v1054 = vld [vmem:[%s3 + $0x4f0] sm:$0xff]
  %v1055 = vld [vmem:[%s3 + $0x4f8] sm:$0xff]
  %v1056 = vld [vmem:[%s3 + $0x500] sm:$0xff]
  %v1057 = vld [vmem:[%s3 + $0x508] sm:$0xff]
  %v1058 = vld [vmem:[%s3 + $0x510] sm:$0xff]
  %v1059 = vld [vmem:[%s3 + $0x518] sm:$0xff]
  %v1060 = vld [vmem:[%s3 + $0x520] sm:$0xff]
  %v1061 = vld [vmem:[%s3 + $0x528] sm:$0xff]
  %v1062 = vld [vmem:[%s3 + $0x530] sm:$0xff]
  %v1063 = vld [vmem:[%s3 + $0x538] sm:$0xff]
  %v1064 = vld [vmem:[%s3 + $0x540] sm:$0xff]
  %v1065 = vld [vmem:[%s3 + $0x548] sm:$0xff]
  %v1066 = vld [vmem:[%s3 + $0x550] sm:$0xff]
  %v1067 = vld [vmem:[%s3 + $0x558] sm:$0xff]
  %v1068 = vld [vmem:[%s3 + $0x560] sm:$0xff]
  %v1069 = vld [vmem:[%s3 + $0x568] sm:$0xff]
  %v1070 = vld [vmem:[%s3 + $0x570] sm:$0xff]
  %v1071 = vld [vmem:[%s3 + $0x578] sm:$0xff]
  %v1072 = vld [vmem:[%s3 + $0x580] sm:$0xff]
  %v1073 = vld [vmem:[%s3 + $0x588] sm:$0xff]
  %v1074 = vld [vmem:[%s3 + $0x590] sm:$0xff]
  %v1075 = vld [vmem:[%s3 + $0x598] sm:$0xff]
  %v1076 = vld [vmem:[%s3 + $0x5a0] sm:$0xff]
  %v1077 = vld [vmem:[%s3 + $0x5a8] sm:$0xff]
  %v1078 = vld [vmem:[%s3 + $0x5b0] sm:$0xff]
  %v1079 = vld [vmem:[%s3 + $0x5b8] sm:$0xff]
  %v1080 = vld [vmem:[%s3 + $0x5c0] sm:$0xff]
  %v1081 = vld [vmem:[%s3 + $0x5c8] sm:$0xff]
  %v1082 = vld [vmem:[%s3 + $0x5d0] sm:$0xff]
  %v1083 = vld [vmem:[%s3 + $0x5d8] sm:$0xff]
  %v1084 = vld [vmem:[%s3 + $0x5e0] sm:$0xff]
  %v1085 = vld [vmem:[%s3 + $0x5e8] sm:$0xff]
  %v1086 = vld [vmem:[%s3 + $0x5f0] sm:$0xff]
  %v1087 = vld [vmem:[%s3 + $0x5f8] sm:$0xff]
  %v1280 = vunpack.c.l.b16 %v896
  %v1281 = vunpack.c.h.b16 %v896
  %v1282 = vunpack.c.l.b16 %v897
  %v1283 = vunpack.c.h.b16 %v897
  %v1284 = vunpack.c.l.b16 %v898
  %v1285 = vunpack.c.h.b16 %v898
  %v1286 = vunpack.c.l.b16 %v899
  %v1287 = vunpack.c.h.b16 %v899
  %v1288 = vunpack.c.l.b16 %v900
  %v1289 = vunpack.c.h.b16 %v900
  %v1290 = vunpack.c.l.b16 %v901
  %v1291 = vunpack.c.h.b16 %v901
  %v1292 = vunpack.c.l.b16 %v902
  %v1293 = vunpack.c.h.b16 %v902
  %v1294 = vunpack.c.l.b16 %v903
  %v1295 = vunpack.c.h.b16 %v903
  %v1296 = vunpack.c.l.b16 %v904
  %v1297 = vunpack.c.h.b16 %v904
  %v1298 = vunpack.c.l.b16 %v905
  %v1299 = vunpack.c.h.b16 %v905
  %v1300 = vunpack.c.l.b16 %v906
  %v1301 = vunpack.c.h.b16 %v906
  %v1302 = vunpack.c.l.b16 %v907
  %v1303 = vunpack.c.h.b16 %v907
  %v1304 = vunpack.c.l.b16 %v908
  %v1305 = vunpack.c.h.b16 %v908
  %v1306 = vunpack.c.l.b16 %v909
  %v1307 = vunpack.c.h.b16 %v909
  %v1308 = vunpack.c.l.b16 %v910
  %v1309 = vunpack.c.h.b16 %v910
  %v1310 = vunpack.c.l.b16 %v911
  %v1311 = vunpack.c.h.b16 %v911
  %v1312 = vunpack.c.l.b16 %v912
  %v1313 = vunpack.c.h.b16 %v912
  %v1314 = vunpack.c.l.b16 %v913
  %v1315 = vunpack.c.h.b16 %v913
  %v1316 = vunpack.c.l.b16 %v914
  %v1317 = vunpack.c.h.b16 %v914
  %v1318 = vunpack.c.l.b16 %v915
  %v1319 = vunpack.c.h.b16 %v915
  %v1320 = vunpack.c.l.b16 %v916
  %v1321 = vunpack.c.h.b16 %v916
  %v1322 = vunpack.c.l.b16 %v917
  %v1323 = vunpack.c.h.b16 %v917
  %v1324 = vunpack.c.l.b16 %v918
  %v1325 = vunpack.c.h.b16 %v918
  %v1326 = vunpack.c.l.b16 %v919
  %v1327 = vunpack.c.h.b16 %v919
  %v1328 = vunpack.c.l.b16 %v920
  %v1329 = vunpack.c.h.b16 %v920
  %v1330 = vunpack.c.l.b16 %v921
  %v1331 = vunpack.c.h.b16 %v921
  %v1332 = vunpack.c.l.b16 %v922
  %v1333 = vunpack.c.h.b16 %v922
  %v1334 = vunpack.c.l.b16 %v923
  %v1335 = vunpack.c.h.b16 %v923
  %v1336 = vunpack.c.l.b16 %v924
  %v1337 = vunpack.c.h.b16 %v924
  %v1338 = vunpack.c.l.b16 %v925
  %v1339 = vunpack.c.h.b16 %v925
  %v1340 = vunpack.c.l.b16 %v926
  %v1341 = vunpack.c.h.b16 %v926
  %v1342 = vunpack.c.l.b16 %v927
  %v1343 = vunpack.c.h.b16 %v927
  %v1344 = vunpack.c.l.b16 %v928
  %v1345 = vunpack.c.h.b16 %v928
  %v1346 = vunpack.c.l.b16 %v929
  %v1347 = vunpack.c.h.b16 %v929
  %v1348 = vunpack.c.l.b16 %v930
  %v1349 = vunpack.c.h.b16 %v930
  %v1350 = vunpack.c.l.b16 %v931
  %v1351 = vunpack.c.h.b16 %v931
  %v1352 = vunpack.c.l.b16 %v932
  %v1353 = vunpack.c.h.b16 %v932
  %v1354 = vunpack.c.l.b16 %v933
  %v1355 = vunpack.c.h.b16 %v933
  %v1356 = vunpack.c.l.b16 %v934
  %v1357 = vunpack.c.h.b16 %v934
  %v1358 = vunpack.c.l.b16 %v935
  %v1359 = vunpack.c.h.b16 %v935
  %v1360 = vunpack.c.l.b16 %v936
  %v1361 = vunpack.c.h.b16 %v936
  %v1362 = vunpack.c.l.b16 %v937
  %v1363 = vunpack.c.h.b16 %v937
  %v1364 = vunpack.c.l.b16 %v938
  %v1365 = vunpack.c.h.b16 %v938
  %v1366 = vunpack.c.l.b16 %v939
  %v1367 = vunpack.c.h.b16 %v939
  %v1368 = vunpack.c.l.b16 %v940
  %v1369 = vunpack.c.h.b16 %v940
  %v1370 = vunpack.c.l.b16 %v941
  %v1371 = vunpack.c.h.b16 %v941
  %v1372 = vunpack.c.l.b16 %v942
  %v1373 = vunpack.c.h.b16 %v942
  %v1374 = vunpack.c.l.b16 %v943
  %v1375 = vunpack.c.h.b16 %v943
  %v1376 = vunpack.c.l.b16 %v944
  %v1377 = vunpack.c.h.b16 %v944
  %v1378 = vunpack.c.l.b16 %v945
  %v1379 = vunpack.c.h.b16 %v945
  %v1380 = vunpack.c.l.b16 %v946
  %v1381 = vunpack.c.h.b16 %v946
  %v1382 = vunpack.c.l.b16 %v947
  %v1383 = vunpack.c.h.b16 %v947
  %v1384 = vunpack.c.l.b16 %v948
  %v1385 = vunpack.c.h.b16 %v948
  %v1386 = vunpack.c.l.b16 %v949
  %v1387 = vunpack.c.h.b16 %v949
  %v1388 = vunpack.c.l.b16 %v950
  %v1389 = vunpack.c.h.b16 %v950
  %v1390 = vunpack.c.l.b16 %v951
  %v1391 = vunpack.c.h.b16 %v951
  %v1392 = vunpack.c.l.b16 %v952
  %v1393 = vunpack.c.h.b16 %v952
  %v1394 = vunpack.c.l.b16 %v953
  %v1395 = vunpack.c.h.b16 %v953
  %v1396 = vunpack.c.l.b16 %v954
  %v1397 = vunpack.c.h.b16 %v954
  %v1398 = vunpack.c.l.b16 %v955
  %v1399 = vunpack.c.h.b16 %v955
  %v1400 = vunpack.c.l.b16 %v956
  %v1401 = vunpack.c.h.b16 %v956
  %v1402 = vunpack.c.l.b16 %v957
  %v1403 = vunpack.c.h.b16 %v957
  %v1404 = vunpack.c.l.b16 %v958
  %v1405 = vunpack.c.h.b16 %v958
  %v1406 = vunpack.c.l.b16 %v959
  %v1407 = vunpack.c.h.b16 %v959
  %v1408 = vunpack.c.l.b16 %v960
  %v1409 = vunpack.c.h.b16 %v960
  %v1410 = vunpack.c.l.b16 %v961
  %v1411 = vunpack.c.h.b16 %v961
  %v1412 = vunpack.c.l.b16 %v962
  %v1413 = vunpack.c.h.b16 %v962
  %v1414 = vunpack.c.l.b16 %v963
  %v1415 = vunpack.c.h.b16 %v963
  %v1416 = vunpack.c.l.b16 %v964
  %v1417 = vunpack.c.h.b16 %v964
  %v1418 = vunpack.c.l.b16 %v965
  %v1419 = vunpack.c.h.b16 %v965
  %v1420 = vunpack.c.l.b16 %v966
  %v1421 = vunpack.c.h.b16 %v966
  %v1422 = vunpack.c.l.b16 %v967
  %v1423 = vunpack.c.h.b16 %v967
  %v1424 = vunpack.c.l.b16 %v968
  %v1425 = vunpack.c.h.b16 %v968
  %v1426 = vunpack.c.l.b16 %v969
  %v1427 = vunpack.c.h.b16 %v969
  %v1428 = vunpack.c.l.b16 %v970
  %v1429 = vunpack.c.h.b16 %v970
  %v1430 = vunpack.c.l.b16 %v971
  %v1431 = vunpack.c.h.b16 %v971
  %v1432 = vunpack.c.l.b16 %v972
  %v1433 = vunpack.c.h.b16 %v972
  %v1434 = vunpack.c.l.b16 %v973
  %v1435 = vunpack.c.h.b16 %v973
  %v1436 = vunpack.c.l.b16 %v974
  %v1437 = vunpack.c.h.b16 %v974
  %v1438 = vunpack.c.l.b16 %v975
  %v1439 = vunpack.c.h.b16 %v975
  %v1440 = vunpack.c.l.b16 %v976
  %v1441 = vunpack.c.h.b16 %v976
  %v1442 = vunpack.c.l.b16 %v977
  %v1443 = vunpack.c.h.b16 %v977
  %v1444 = vunpack.c.l.b16 %v978
  %v1445 = vunpack.c.h.b16 %v978
  %v1446 = vunpack.c.l.b16 %v979
  %v1447 = vunpack.c.h.b16 %v979
  %v1448 = vunpack.c.l.b16 %v980
  %v1449 = vunpack.c.h.b16 %v980
  %v1450 = vunpack.c.l.b16 %v981
  %v1451 = vunpack.c.h.b16 %v981
  %v1452 = vunpack.c.l.b16 %v982
  %v1453 = vunpack.c.h.b16 %v982
  %v1454 = vunpack.c.l.b16 %v983
  %v1455 = vunpack.c.h.b16 %v983
  %v1456 = vunpack.c.l.b16 %v984
  %v1457 = vunpack.c.h.b16 %v984
  %v1458 = vunpack.c.l.b16 %v985
  %v1459 = vunpack.c.h.b16 %v985
  %v1460 = vunpack.c.l.b16 %v986
  %v1461 = vunpack.c.h.b16 %v986
  %v1462 = vunpack.c.l.b16 %v987
  %v1463 = vunpack.c.h.b16 %v987
  %v1464 = vunpack.c.l.b16 %v988
  %v1465 = vunpack.c.h.b16 %v988
  %v1466 = vunpack.c.l.b16 %v989
  %v1467 = vunpack.c.h.b16 %v989
  %v1468 = vunpack.c.l.b16 %v990
  %v1469 = vunpack.c.h.b16 %v990
  %v1470 = vunpack.c.l.b16 %v991
  %v1471 = vunpack.c.h.b16 %v991
  %v1472 = vunpack.c.l.b16 %v992
  %v1473 = vunpack.c.h.b16 %v992
  %v1474 = vunpack.c.l.b16 %v993
  %v1475 = vunpack.c.h.b16 %v993
  %v1476 = vunpack.c.l.b16 %v994
  %v1477 = vunpack.c.h.b16 %v994
  %v1478 = vunpack.c.l.b16 %v995
  %v1479 = vunpack.c.h.b16 %v995
  %v1480 = vunpack.c.l.b16 %v996
  %v1481 = vunpack.c.h.b16 %v996
  %v1482 = vunpack.c.l.b16 %v997
  %v1483 = vunpack.c.h.b16 %v997
  %v1484 = vunpack.c.l.b16 %v998
  %v1485 = vunpack.c.h.b16 %v998
  %v1486 = vunpack.c.l.b16 %v999
  %v1487 = vunpack.c.h.b16 %v999
  %v1488 = vunpack.c.l.b16 %v1000
  %v1489 = vunpack.c.h.b16 %v1000
  %v1490 = vunpack.c.l.b16 %v1001
  %v1491 = vunpack.c.h.b16 %v1001
  %v1492 = vunpack.c.l.b16 %v1002
  %v1493 = vunpack.c.h.b16 %v1002
  %v1494 = vunpack.c.l.b16 %v1003
  %v1495 = vunpack.c.h.b16 %v1003
  %v1496 = vunpack.c.l.b16 %v1004
  %v1497 = vunpack.c.h.b16 %v1004
  %v1498 = vunpack.c.l.b16 %v1005
  %v1499 = vunpack.c.h.b16 %v1005
  %v1500 = vunpack.c.l.b16 %v1006
  %v1501 = vunpack.c.h.b16 %v1006
  %v1502 = vunpack.c.l.b16 %v1007
  %v1503 = vunpack.c.h.b16 %v1007
  %v1504 = vunpack.c.l.b16 %v1008
  %v1505 = vunpack.c.h.b16 %v1008
  %v1506 = vunpack.c.l.b16 %v1009
  %v1507 = vunpack.c.h.b16 %v1009
  %v1508 = vunpack.c.l.b16 %v1010
  %v1509 = vunpack.c.h.b16 %v1010
  %v1510 = vunpack.c.l.b16 %v1011
  %v1511 = vunpack.c.h.b16 %v1011
  %v1512 = vunpack.c.l.b16 %v1012
  %v1513 = vunpack.c.h.b16 %v1012
  %v1514 = vunpack.c.l.b16 %v1013
  %v1515 = vunpack.c.h.b16 %v1013
  %v1516 = vunpack.c.l.b16 %v1014
  %v1517 = vunpack.c.h.b16 %v1014
  %v1518 = vunpack.c.l.b16 %v1015
  %v1519 = vunpack.c.h.b16 %v1015
  %v1520 = vunpack.c.l.b16 %v1016
  %v1521 = vunpack.c.h.b16 %v1016
  %v1522 = vunpack.c.l.b16 %v1017
  %v1523 = vunpack.c.h.b16 %v1017
  %v1524 = vunpack.c.l.b16 %v1018
  %v1525 = vunpack.c.h.b16 %v1018
  %v1526 = vunpack.c.l.b16 %v1019
  %v1527 = vunpack.c.h.b16 %v1019
  %v1528 = vunpack.c.l.b16 %v1020
  %v1529 = vunpack.c.h.b16 %v1020
  %v1530 = vunpack.c.l.b16 %v1021
  %v1531 = vunpack.c.h.b16 %v1021
  %v1532 = vunpack.c.l.b16 %v1022
  %v1533 = vunpack.c.h.b16 %v1022
  %v1534 = vunpack.c.l.b16 %v1023
  %v1535 = vunpack.c.h.b16 %v1023
  %v1536 = vunpack.c.l.b16 %v1024
  %v1537 = vunpack.c.h.b16 %v1024
  %v1538 = vunpack.c.l.b16 %v1025
  %v1539 = vunpack.c.h.b16 %v1025
  %v1540 = vunpack.c.l.b16 %v1026
  %v1541 = vunpack.c.h.b16 %v1026
  %v1542 = vunpack.c.l.b16 %v1027
  %v1543 = vunpack.c.h.b16 %v1027
  %v1544 = vunpack.c.l.b16 %v1028
  %v1545 = vunpack.c.h.b16 %v1028
  %v1546 = vunpack.c.l.b16 %v1029
  %v1547 = vunpack.c.h.b16 %v1029
  %v1548 = vunpack.c.l.b16 %v1030
  %v1549 = vunpack.c.h.b16 %v1030
  %v1550 = vunpack.c.l.b16 %v1031
  %v1551 = vunpack.c.h.b16 %v1031
  %v1552 = vunpack.c.l.b16 %v1032
  %v1553 = vunpack.c.h.b16 %v1032
  %v1554 = vunpack.c.l.b16 %v1033
  %v1555 = vunpack.c.h.b16 %v1033
  %v1556 = vunpack.c.l.b16 %v1034
  %v1557 = vunpack.c.h.b16 %v1034
  %v1558 = vunpack.c.l.b16 %v1035
  %v1559 = vunpack.c.h.b16 %v1035
  %v1560 = vunpack.c.l.b16 %v1036
  %v1561 = vunpack.c.h.b16 %v1036
  %v1562 = vunpack.c.l.b16 %v1037
  %v1563 = vunpack.c.h.b16 %v1037
  %v1564 = vunpack.c.l.b16 %v1038
  %v1565 = vunpack.c.h.b16 %v1038
  %v1566 = vunpack.c.l.b16 %v1039
  %v1567 = vunpack.c.h.b16 %v1039
  %v1568 = vunpack.c.l.b16 %v1040
  %v1569 = vunpack.c.h.b16 %v1040
  %v1570 = vunpack.c.l.b16 %v1041
  %v1571 = vunpack.c.h.b16 %v1041
  %v1572 = vunpack.c.l.b16 %v1042
  %v1573 = vunpack.c.h.b16 %v1042
  %v1574 = vunpack.c.l.b16 %v1043
  %v1575 = vunpack.c.h.b16 %v1043
  %v1576 = vunpack.c.l.b16 %v1044
  %v1577 = vunpack.c.h.b16 %v1044
  %v1578 = vunpack.c.l.b16 %v1045
  %v1579 = vunpack.c.h.b16 %v1045
  %v1580 = vunpack.c.l.b16 %v1046
  %v1581 = vunpack.c.h.b16 %v1046
  %v1582 = vunpack.c.l.b16 %v1047
  %v1583 = vunpack.c.h.b16 %v1047
  %v1584 = vunpack.c.l.b16 %v1048
  %v1585 = vunpack.c.h.b16 %v1048
  %v1586 = vunpack.c.l.b16 %v1049
  %v1587 = vunpack.c.h.b16 %v1049
  %v1588 = vunpack.c.l.b16 %v1050
  %v1589 = vunpack.c.h.b16 %v1050
  %v1590 = vunpack.c.l.b16 %v1051
  %v1591 = vunpack.c.h.b16 %v1051
  %v1592 = vunpack.c.l.b16 %v1052
  %v1593 = vunpack.c.h.b16 %v1052
  %v1594 = vunpack.c.l.b16 %v1053
  %v1595 = vunpack.c.h.b16 %v1053
  %v1596 = vunpack.c.l.b16 %v1054
  %v1597 = vunpack.c.h.b16 %v1054
  %v1598 = vunpack.c.l.b16 %v1055
  %v1599 = vunpack.c.h.b16 %v1055
  %v1600 = vunpack.c.l.b16 %v1056
  %v1601 = vunpack.c.h.b16 %v1056
  %v1602 = vunpack.c.l.b16 %v1057
  %v1603 = vunpack.c.h.b16 %v1057
  %v1604 = vunpack.c.l.b16 %v1058
  %v1605 = vunpack.c.h.b16 %v1058
  %v1606 = vunpack.c.l.b16 %v1059
  %v1607 = vunpack.c.h.b16 %v1059
  %v1608 = vunpack.c.l.b16 %v1060
  %v1609 = vunpack.c.h.b16 %v1060
  %v1610 = vunpack.c.l.b16 %v1061
  %v1611 = vunpack.c.h.b16 %v1061
  %v1612 = vunpack.c.l.b16 %v1062
  %v1613 = vunpack.c.h.b16 %v1062
  %v1614 = vunpack.c.l.b16 %v1063
  %v1615 = vunpack.c.h.b16 %v1063
  %v1616 = vunpack.c.l.b16 %v1064
  %v1617 = vunpack.c.h.b16 %v1064
  %v1618 = vunpack.c.l.b16 %v1065
  %v1619 = vunpack.c.h.b16 %v1065
  %v1620 = vunpack.c.l.b16 %v1066
  %v1621 = vunpack.c.h.b16 %v1066
  %v1622 = vunpack.c.l.b16 %v1067
  %v1623 = vunpack.c.h.b16 %v1067
  %v1624 = vunpack.c.l.b16 %v1068
  %v1625 = vunpack.c.h.b16 %v1068
  %v1626 = vunpack.c.l.b16 %v1069
  %v1627 = vunpack.c.h.b16 %v1069
  %v1628 = vunpack.c.l.b16 %v1070
  %v1629 = vunpack.c.h.b16 %v1070
  %v1630 = vunpack.c.l.b16 %v1071
  %v1631 = vunpack.c.h.b16 %v1071
  %v1632 = vunpack.c.l.b16 %v1072
  %v1633 = vunpack.c.h.b16 %v1072
  %v1634 = vunpack.c.l.b16 %v1073
  %v1635 = vunpack.c.h.b16 %v1073
  %v1636 = vunpack.c.l.b16 %v1074
  %v1637 = vunpack.c.h.b16 %v1074
  %v1638 = vunpack.c.l.b16 %v1075
  %v1639 = vunpack.c.h.b16 %v1075
  %v1640 = vunpack.c.l.b16 %v1076
  %v1641 = vunpack.c.h.b16 %v1076
  %v1642 = vunpack.c.l.b16 %v1077
  %v1643 = vunpack.c.h.b16 %v1077
  %v1644 = vunpack.c.l.b16 %v1078
  %v1645 = vunpack.c.h.b16 %v1078
  %v1646 = vunpack.c.l.b16 %v1079
  %v1647 = vunpack.c.h.b16 %v1079
  %v1648 = vunpack.c.l.b16 %v1080
  %v1649 = vunpack.c.h.b16 %v1080
  %v1650 = vunpack.c.l.b16 %v1081
  %v1651 = vunpack.c.h.b16 %v1081
  %v1652 = vunpack.c.l.b16 %v1082
  %v1653 = vunpack.c.h.b16 %v1082
  %v1654 = vunpack.c.l.b16 %v1083
  %v1655 = vunpack.c.h.b16 %v1083
  %v1656 = vunpack.c.l.b16 %v1084
  %v1657 = vunpack.c.h.b16 %v1084
  %v1658 = vunpack.c.l.b16 %v1085
  %v1659 = vunpack.c.h.b16 %v1085
  %v1660 = vunpack.c.l.b16 %v1086
  %v1661 = vunpack.c.h.b16 %v1086
  %v1662 = vunpack.c.l.b16 %v1087
  %v1663 = vunpack.c.h.b16 %v1087
  %v1664 = vpack.c.b16 %v1284, %v1280
  %v1665 = vpack.c.b16 %v1285, %v1281
  %v1666 = vpack.c.b16 %v1286, %v1282
  %v1667 = vpack.c.b16 %v1287, %v1283
  %v1668 = vpack.c.b16 %v1292, %v1288
  %v1669 = vpack.c.b16 %v1293, %v1289
  %v1670 = vpack.c.b16 %v1294, %v1290
  %v1671 = vpack.c.b16 %v1295, %v1291
  %v1672 = vpack.c.b16 %v1300, %v1296
  %v1673 = vpack.c.b16 %v1301, %v1297
  %v1674 = vpack.c.b16 %v1302, %v1298
  %v1675 = vpack.c.b16 %v1303, %v1299
  %v1676 = vpack.c.b16 %v1308, %v1304
  %v1677 = vpack.c.b16 %v1309, %v1305
  %v1678 = vpack.c.b16 %v1310, %v1306
  %v1679 = vpack.c.b16 %v1311, %v1307
  %v1680 = vpack.c.b16 %v1316, %v1312
  %v1681 = vpack.c.b16 %v1317, %v1313
  %v1682 = vpack.c.b16 %v1318, %v1314
  %v1683 = vpack.c.b16 %v1319, %v1315
  %v1684 = vpack.c.b16 %v1324, %v1320
  %v1685 = vpack.c.b16 %v1325, %v1321
  %v1686 = vpack.c.b16 %v1326, %v1322
  %v1687 = vpack.c.b16 %v1327, %v1323
  %v1688 = vpack.c.b16 %v1332, %v1328
  %v1689 = vpack.c.b16 %v1333, %v1329
  %v1690 = vpack.c.b16 %v1334, %v1330
  %v1691 = vpack.c.b16 %v1335, %v1331
  %v1692 = vpack.c.b16 %v1340, %v1336
  %v1693 = vpack.c.b16 %v1341, %v1337
  %v1694 = vpack.c.b16 %v1342, %v1338
  %v1695 = vpack.c.b16 %v1343, %v1339
  %v1696 = vpack.c.b16 %v1348, %v1344
  %v1697 = vpack.c.b16 %v1349, %v1345
  %v1698 = vpack.c.b16 %v1350, %v1346
  %v1699 = vpack.c.b16 %v1351, %v1347
  %v1700 = vpack.c.b16 %v1356, %v1352
  %v1701 = vpack.c.b16 %v1357, %v1353
  %v1702 = vpack.c.b16 %v1358, %v1354
  %v1703 = vpack.c.b16 %v1359, %v1355
  %v1704 = vpack.c.b16 %v1364, %v1360
  %v1705 = vpack.c.b16 %v1365, %v1361
  %v1706 = vpack.c.b16 %v1366, %v1362
  %v1707 = vpack.c.b16 %v1367, %v1363
  %v1708 = vpack.c.b16 %v1372, %v1368
  %v1709 = vpack.c.b16 %v1373, %v1369
  %v1710 = vpack.c.b16 %v1374, %v1370
  %v1711 = vpack.c.b16 %v1375, %v1371
  %v1712 = vpack.c.b16 %v1380, %v1376
  %v1713 = vpack.c.b16 %v1381, %v1377
  %v1714 = vpack.c.b16 %v1382, %v1378
  %v1715 = vpack.c.b16 %v1383, %v1379
  %v1716 = vpack.c.b16 %v1388, %v1384
  %v1717 = vpack.c.b16 %v1389, %v1385
  %v1718 = vpack.c.b16 %v1390, %v1386
  %v1719 = vpack.c.b16 %v1391, %v1387
  %v1720 = vpack.c.b16 %v1396, %v1392
  %v1721 = vpack.c.b16 %v1397, %v1393
  %v1722 = vpack.c.b16 %v1398, %v1394
  %v1723 = vpack.c.b16 %v1399, %v1395
  %v1724 = vpack.c.b16 %v1404, %v1400
  %v1725 = vpack.c.b16 %v1405, %v1401
  %v1726 = vpack.c.b16 %v1406, %v1402
  %v1727 = vpack.c.b16 %v1407, %v1403
  %v1728 = vpack.c.b16 %v1412, %v1408
  %v1729 = vpack.c.b16 %v1413, %v1409
  %v1730 = vpack.c.b16 %v1414, %v1410
  %v1731 = vpack.c.b16 %v1415, %v1411
  %v1732 = vpack.c.b16 %v1420, %v1416
  %v1733 = vpack.c.b16 %v1421, %v1417
  %v1734 = vpack.c.b16 %v1422, %v1418
  %v1735 = vpack.c.b16 %v1423, %v1419
  %v1736 = vpack.c.b16 %v1428, %v1424
  %v1737 = vpack.c.b16 %v1429, %v1425
  %v1738 = vpack.c.b16 %v1430, %v1426
  %v1739 = vpack.c.b16 %v1431, %v1427
  %v1740 = vpack.c.b16 %v1436, %v1432
  %v1741 = vpack.c.b16 %v1437, %v1433
  %v1742 = vpack.c.b16 %v1438, %v1434
  %v1743 = vpack.c.b16 %v1439, %v1435
  %v1744 = vpack.c.b16 %v1444, %v1440
  %v1745 = vpack.c.b16 %v1445, %v1441
  %v1746 = vpack.c.b16 %v1446, %v1442
  %v1747 = vpack.c.b16 %v1447, %v1443
  %v1748 = vpack.c.b16 %v1452, %v1448
  %v1749 = vpack.c.b16 %v1453, %v1449
  %v1750 = vpack.c.b16 %v1454, %v1450
  %v1751 = vpack.c.b16 %v1455, %v1451
  %v1752 = vpack.c.b16 %v1460, %v1456
  %v1753 = vpack.c.b16 %v1461, %v1457
  %v1754 = vpack.c.b16 %v1462, %v1458
  %v1755 = vpack.c.b16 %v1463, %v1459
  %v1756 = vpack.c.b16 %v1468, %v1464
  %v1757 = vpack.c.b16 %v1469, %v1465
  %v1758 = vpack.c.b16 %v1470, %v1466
  %v1759 = vpack.c.b16 %v1471, %v1467
  %v1760 = vpack.c.b16 %v1476, %v1472
  %v1761 = vpack.c.b16 %v1477, %v1473
  %v1762 = vpack.c.b16 %v1478, %v1474
  %v1763 = vpack.c.b16 %v1479, %v1475
  %v1764 = vpack.c.b16 %v1484, %v1480
  %v1765 = vpack.c.b16 %v1485, %v1481
  %v1766 = vpack.c.b16 %v1486, %v1482
  %v1767 = vpack.c.b16 %v1487, %v1483
  %v1768 = vpack.c.b16 %v1492, %v1488
  %v1769 = vpack.c.b16 %v1493, %v1489
  %v1770 = vpack.c.b16 %v1494, %v1490
  %v1771 = vpack.c.b16 %v1495, %v1491
  %v1772 = vpack.c.b16 %v1500, %v1496
  %v1773 = vpack.c.b16 %v1501, %v1497
  %v1774 = vpack.c.b16 %v1502, %v1498
  %v1775 = vpack.c.b16 %v1503, %v1499
  %v1776 = vpack.c.b16 %v1508, %v1504
  %v1777 = vpack.c.b16 %v1509, %v1505
  %v1778 = vpack.c.b16 %v1510, %v1506
  %v1779 = vpack.c.b16 %v1511, %v1507
  %v1780 = vpack.c.b16 %v1516, %v1512
  %v1781 = vpack.c.b16 %v1517, %v1513
  %v1782 = vpack.c.b16 %v1518, %v1514
  %v1783 = vpack.c.b16 %v1519, %v1515
  %v1784 = vpack.c.b16 %v1524, %v1520
  %v1785 = vpack.c.b16 %v1525, %v1521
  %v1786 = vpack.c.b16 %v1526, %v1522
  %v1787 = vpack.c.b16 %v1527, %v1523
  %v1788 = vpack.c.b16 %v1532, %v1528
  %v1789 = vpack.c.b16 %v1533, %v1529
  %v1790 = vpack.c.b16 %v1534, %v1530
  %v1791 = vpack.c.b16 %v1535, %v1531
  %v1792 = vpack.c.b16 %v1540, %v1536
  %v1793 = vpack.c.b16 %v1541, %v1537
  %v1794 = vpack.c.b16 %v1542, %v1538
  %v1795 = vpack.c.b16 %v1543, %v1539
  %v1796 = vpack.c.b16 %v1548, %v1544
  %v1797 = vpack.c.b16 %v1549, %v1545
  %v1798 = vpack.c.b16 %v1550, %v1546
  %v1799 = vpack.c.b16 %v1551, %v1547
  %v1800 = vpack.c.b16 %v1556, %v1552
  %v1801 = vpack.c.b16 %v1557, %v1553
  %v1802 = vpack.c.b16 %v1558, %v1554
  %v1803 = vpack.c.b16 %v1559, %v1555
  %v1804 = vpack.c.b16 %v1564, %v1560
  %v1805 = vpack.c.b16 %v1565, %v1561
  %v1806 = vpack.c.b16 %v1566, %v1562
  %v1807 = vpack.c.b16 %v1567, %v1563
  %v1808 = vpack.c.b16 %v1572, %v1568
  %v1809 = vpack.c.b16 %v1573, %v1569
  %v1810 = vpack.c.b16 %v1574, %v1570
  %v1811 = vpack.c.b16 %v1575, %v1571
  %v1812 = vpack.c.b16 %v1580, %v1576
  %v1813 = vpack.c.b16 %v1581, %v1577
  %v1814 = vpack.c.b16 %v1582, %v1578
  %v1815 = vpack.c.b16 %v1583, %v1579
  %v1816 = vpack.c.b16 %v1588, %v1584
  %v1817 = vpack.c.b16 %v1589, %v1585
  %v1818 = vpack.c.b16 %v1590, %v1586
  %v1819 = vpack.c.b16 %v1591, %v1587
  %v1820 = vpack.c.b16 %v1596, %v1592
  %v1821 = vpack.c.b16 %v1597, %v1593
  %v1822 = vpack.c.b16 %v1598, %v1594
  %v1823 = vpack.c.b16 %v1599, %v1595
  %v1824 = vpack.c.b16 %v1604, %v1600
  %v1825 = vpack.c.b16 %v1605, %v1601
  %v1826 = vpack.c.b16 %v1606, %v1602
  %v1827 = vpack.c.b16 %v1607, %v1603
  %v1828 = vpack.c.b16 %v1612, %v1608
  %v1829 = vpack.c.b16 %v1613, %v1609
  %v1830 = vpack.c.b16 %v1614, %v1610
  %v1831 = vpack.c.b16 %v1615, %v1611
  %v1832 = vpack.c.b16 %v1620, %v1616
  %v1833 = vpack.c.b16 %v1621, %v1617
  %v1834 = vpack.c.b16 %v1622, %v1618
  %v1835 = vpack.c.b16 %v1623, %v1619
  %v1836 = vpack.c.b16 %v1628, %v1624
  %v1837 = vpack.c.b16 %v1629, %v1625
  %v1838 = vpack.c.b16 %v1630, %v1626
  %v1839 = vpack.c.b16 %v1631, %v1627
  %v1840 = vpack.c.b16 %v1636, %v1632
  %v1841 = vpack.c.b16 %v1637, %v1633
  %v1842 = vpack.c.b16 %v1638, %v1634
  %v1843 = vpack.c.b16 %v1639, %v1635
  %v1844 = vpack.c.b16 %v1644, %v1640
  %v1845 = vpack.c.b16 %v1645, %v1641
  %v1846 = vpack.c.b16 %v1646, %v1642
  %v1847 = vpack.c.b16 %v1647, %v1643
  %v1848 = vpack.c.b16 %v1652, %v1648
  %v1849 = vpack.c.b16 %v1653, %v1649
  %v1850 = vpack.c.b16 %v1654, %v1650
  %v1851 = vpack.c.b16 %v1655, %v1651
  %v1852 = vpack.c.b16 %v1660, %v1656
  %v1853 = vpack.c.b16 %v1661, %v1657
  %v1854 = vpack.c.b16 %v1662, %v1658
  %v1855 = vpack.c.b16 %v1663, %v1659
  %2048 = vmatprep.subr.bf16.mxu0 %v1693
  %2049 = vmatpush1.bf16.msra.mxu0 %v1692
  %2050 = vmatprep.subr.bf16.mxu0 %v1689
  %2051 = vmatpush1.bf16.msra.mxu0 %v1688
  %2052 = vmatprep.subr.bf16.mxu0 %v1685
  %2053 = vmatpush1.bf16.msra.mxu0 %v1684
  %2054 = vmatprep.subr.bf16.mxu0 %v1681
  %2055 = vmatpush1.bf16.msra.mxu0 %v1680
  %2056 = vmatprep.subr.bf16.mxu0 %v1677
  %2057 = vmatpush1.bf16.msra.mxu0 %v1676
  %2058 = vmatprep.subr.bf16.mxu0 %v1673
  %2059 = vmatpush1.bf16.msra.mxu0 %v1672
  %2060 = vmatprep.subr.bf16.mxu0 %v1669
  %2061 = vmatpush1.bf16.msra.mxu0 %v1668
  %2062 = vmatprep.subr.bf16.mxu0 %v1665
  %2063 = vmatpush1.bf16.msra.mxu0 %v1664
  %2064 = vmatprep.subr.bf16.mxu0 %v1725
  %2065 = vmatpush2.bf16.msra.mxu0 %v1724
  %2066 = vmatprep.subr.bf16.mxu0 %v1721
  %2067 = vmatpush2.bf16.msra.mxu0 %v1720
  %2068 = vmatprep.subr.bf16.mxu0 %v1717
  %2069 = vmatpush2.bf16.msra.mxu0 %v1716
  %2070 = vmatprep.subr.bf16.mxu0 %v1713
  %2071 = vmatpush2.bf16.msra.mxu0 %v1712
  %2072 = vmatprep.subr.bf16.mxu0 %v1709
  %2073 = vmatpush2.bf16.msra.mxu0 %v1708
  %2074 = vmatprep.subr.bf16.mxu0 %v1705
  %2075 = vmatpush2.bf16.msra.mxu0 %v1704
  %2076 = vmatprep.subr.bf16.mxu0 %v1701
  %2077 = vmatpush2.bf16.msra.mxu0 %v1700
  %2078 = vmatprep.subr.bf16.mxu0 %v1697
  %2079 = vmatpush2.bf16.msra.mxu0 %v1696
  %2080 = vmatprep.mubr.bf16.mxu0 %v873
  %2081 = vmatmul.mubr.bf16.gmra.mxu0 %v872
  %v2082 = vpop.f32.mrf.mxu0
  %v2083 = vadd.f32 0.0, %v2082
  %v2084 = vpop.f32.mrf.mxu0
  %v2085 = vadd.f32 0.0, %v2084
  %v2086 = vpop.f32.mrf.mxu0
  %v2087 = vadd.f32 0.0, %v2086
  %v2088 = vpop.f32.mrf.mxu0
  %v2089 = vadd.f32 0.0, %v2088
  %2090 = vmatprep.mubr.bf16.mxu0 %v879
  %2091 = vmatmul.mubr.bf16.gmra.mxu0 %v878
  %v2092 = vpop.f32.mrf.mxu0
  %v2093 = vadd.f32 0.0, %v2092
  %v2094 = vpop.f32.mrf.mxu0
  %v2095 = vadd.f32 0.0, %v2094
  %v2096 = vpop.f32.mrf.mxu0
  %v2097 = vadd.f32 0.0, %v2096
  %v2098 = vpop.f32.mrf.mxu0
  %v2099 = vadd.f32 0.0, %v2098
  %2100 = vmatprep.mubr.bf16.mxu0 %v885
  %2101 = vmatmul.mubr.bf16.gmra.mxu0 %v884
  %v2102 = vpop.f32.mrf.mxu0
  %v2103 = vadd.f32 0.0, %v2102
  %v2104 = vpop.f32.mrf.mxu0
  %v2105 = vadd.f32 0.0, %v2104
  %v2106 = vpop.f32.mrf.mxu0
  %v2107 = vadd.f32 0.0, %v2106
  %v2108 = vpop.f32.mrf.mxu0
  %v2109 = vadd.f32 0.0, %v2108
  %2110 = vmatprep.mubr.bf16.mxu0 %v891
  %2111 = vmatmul.mubr.bf16.gmra.mxu0 %v890
  %v2112 = vpop.f32.mrf.mxu0
  %v2113 = vadd.f32 0.0, %v2112
  %v2114 = vpop.f32.mrf.mxu0
  %v2115 = vadd.f32 0.0, %v2114
  %v2116 = vpop.f32.mrf.mxu0
  %v2117 = vadd.f32 0.0, %v2116
  %v2118 = vpop.f32.mrf.mxu0
  %v2119 = vadd.f32 0.0, %v2118
  %2120 = vdwg.mxu0
  %2121 = vmatprep.subr.bf16.mxu0 %v1757
  %2122 = vmatpush1.bf16.msra.mxu0 %v1756
  %2123 = vmatprep.subr.bf16.mxu0 %v1753
  %2124 = vmatpush1.bf16.msra.mxu0 %v1752
  %2125 = vmatprep.subr.bf16.mxu0 %v1749
  %2126 = vmatpush1.bf16.msra.mxu0 %v1748
  %2127 = vmatprep.subr.bf16.mxu0 %v1745
  %2128 = vmatpush1.bf16.msra.mxu0 %v1744
  %2129 = vmatprep.subr.bf16.mxu0 %v1741
  %2130 = vmatpush1.bf16.msra.mxu0 %v1740
  %2131 = vmatprep.subr.bf16.mxu0 %v1737
  %2132 = vmatpush1.bf16.msra.mxu0 %v1736
  %2133 = vmatprep.subr.bf16.mxu0 %v1733
  %2134 = vmatpush1.bf16.msra.mxu0 %v1732
  %2135 = vmatprep.subr.bf16.mxu0 %v1729
  %2136 = vmatpush1.bf16.msra.mxu0 %v1728
  %2137 = vmatprep.subr.bf16.mxu0 %v1789
  %2138 = vmatpush2.bf16.msra.mxu0 %v1788
  %2139 = vmatprep.subr.bf16.mxu0 %v1785
  %2140 = vmatpush2.bf16.msra.mxu0 %v1784
  %2141 = vmatprep.subr.bf16.mxu0 %v1781
  %2142 = vmatpush2.bf16.msra.mxu0 %v1780
  %2143 = vmatprep.subr.bf16.mxu0 %v1777
  %2144 = vmatpush2.bf16.msra.mxu0 %v1776
  %2145 = vmatprep.subr.bf16.mxu0 %v1773
  %2146 = vmatpush2.bf16.msra.mxu0 %v1772
  %2147 = vmatprep.subr.bf16.mxu0 %v1769
  %2148 = vmatpush2.bf16.msra.mxu0 %v1768
  %2149 = vmatprep.subr.bf16.mxu0 %v1765
  %2150 = vmatpush2.bf16.msra.mxu0 %v1764
  %2151 = vmatprep.subr.bf16.mxu0 %v1761
  %2152 = vmatpush2.bf16.msra.mxu0 %v1760
  %2153 = vmatprep.mubr.bf16.mxu0 %v875
  %2154 = vmatmul.mubr.bf16.gmra.mxu0 %v874
  %v2155 = vpop.f32.mrf.mxu0
  %v2156 = vadd.f32 %v2083, %v2155
  %v2157 = vpop.f32.mrf.mxu0
  %v2158 = vadd.f32 %v2085, %v2157
  %v2159 = vpop.f32.mrf.mxu0
  %v2160 = vadd.f32 %v2087, %v2159
  %v2161 = vpop.f32.mrf.mxu0
  %v2162 = vadd.f32 %v2089, %v2161
  %2163 = vmatprep.mubr.bf16.mxu0 %v881
  %2164 = vmatmul.mubr.bf16.gmra.mxu0 %v880
  %v2165 = vpop.f32.mrf.mxu0
  %v2166 = vadd.f32 %v2093, %v2165
  %v2167 = vpop.f32.mrf.mxu0
  %v2168 = vadd.f32 %v2095, %v2167
  %v2169 = vpop.f32.mrf.mxu0
  %v2170 = vadd.f32 %v2097, %v2169
  %v2171 = vpop.f32.mrf.mxu0
  %v2172 = vadd.f32 %v2099, %v2171
  %2173 = vmatprep.mubr.bf16.mxu0 %v887
  %2174 = vmatmul.mubr.bf16.gmra.mxu0 %v886
  %v2175 = vpop.f32.mrf.mxu0
  %v2176 = vadd.f32 %v2103, %v2175
  %v2177 = vpop.f32.mrf.mxu0
  %v2178 = vadd.f32 %v2105, %v2177
  %v2179 = vpop.f32.mrf.mxu0
  %v2180 = vadd.f32 %v2107, %v2179
  %v2181 = vpop.f32.mrf.mxu0
  %v2182 = vadd.f32 %v2109, %v2181
  %2183 = vmatprep.mubr.bf16.mxu0 %v893
  %2184 = vmatmul.mubr.bf16.gmra.mxu0 %v892
  %v2185 = vpop.f32.mrf.mxu0
  %v2186 = vadd.f32 %v2113, %v2185
  %v2187 = vpop.f32.mrf.mxu0
  %v2188 = vadd.f32 %v2115, %v2187
  %v2189 = vpop.f32.mrf.mxu0
  %v2190 = vadd.f32 %v2117, %v2189
  %v2191 = vpop.f32.mrf.mxu0
  %v2192 = vadd.f32 %v2119, %v2191
  %2193 = vdwg.mxu0
  %2194 = vmatprep.subr.bf16.mxu0 %v1821
  %2195 = vmatpush1.bf16.msra.mxu0 %v1820
  %2196 = vmatprep.subr.bf16.mxu0 %v1817
  %2197 = vmatpush1.bf16.msra.mxu0 %v1816
  %2198 = vmatprep.subr.bf16.mxu0 %v1813
  %2199 = vmatpush1.bf16.msra.mxu0 %v1812
  %2200 = vmatprep.subr.bf16.mxu0 %v1809
  %2201 = vmatpush1.bf16.msra.mxu0 %v1808
  %2202 = vmatprep.subr.bf16.mxu0 %v1805
  %2203 = vmatpush1.bf16.msra.mxu0 %v1804
  %2204 = vmatprep.subr.bf16.mxu0 %v1801
  %2205 = vmatpush1.bf16.msra.mxu0 %v1800
  %2206 = vmatprep.subr.bf16.mxu0 %v1797
  %2207 = vmatpush1.bf16.msra.mxu0 %v1796
  %2208 = vmatprep.subr.bf16.mxu0 %v1793
  %2209 = vmatpush1.bf16.msra.mxu0 %v1792
  %2210 = vmatprep.subr.bf16.mxu0 %v1853
  %2211 = vmatpush2.bf16.msra.mxu0 %v1852
  %2212 = vmatprep.subr.bf16.mxu0 %v1849
  %2213 = vmatpush2.bf16.msra.mxu0 %v1848
  %2214 = vmatprep.subr.bf16.mxu0 %v1845
  %2215 = vmatpush2.bf16.msra.mxu0 %v1844
  %2216 = vmatprep.subr.bf16.mxu0 %v1841
  %2217 = vmatpush2.bf16.msra.mxu0 %v1840
  %2218 = vmatprep.subr.bf16.mxu0 %v1837
  %2219 = vmatpush2.bf16.msra.mxu0 %v1836
  %2220 = vmatprep.subr.bf16.mxu0 %v1833
  %2221 = vmatpush2.bf16.msra.mxu0 %v1832
  %2222 = vmatprep.subr.bf16.mxu0 %v1829
  %2223 = vmatpush2.bf16.msra.mxu0 %v1828
  %2224 = vmatprep.subr.bf16.mxu0 %v1825
  %2225 = vmatpush2.bf16.msra.mxu0 %v1824
  %2226 = vmatprep.mubr.bf16.mxu0 %v877
  %2227 = vmatmul.mubr.bf16.gmra.mxu0 %v876
  %v2228 = vpop.f32.mrf.mxu0
  %v2229 = vadd.f32 %v2156, %v2228
  %v2230 = vpop.f32.mrf.mxu0
  %v2231 = vadd.f32 %v2158, %v2230
  %v2232 = vpop.f32.mrf.mxu0
  %v2233 = vadd.f32 %v2160, %v2232
  %v2234 = vpop.f32.mrf.mxu0
  %v2235 = vadd.f32 %v2162, %v2234
  %2236 = vmatprep.mubr.bf16.mxu0 %v883
  %2237 = vmatmul.mubr.bf16.gmra.mxu0 %v882
  %v2238 = vpop.f32.mrf.mxu0
  %v2239 = vadd.f32 %v2166, %v2238
  %v2240 = vpop.f32.mrf.mxu0
  %v2241 = vadd.f32 %v2168, %v2240
  %v2242 = vpop.f32.mrf.mxu0
  %v2243 = vadd.f32 %v2170, %v2242
  %v2244 = vpop.f32.mrf.mxu0
  %v2245 = vadd.f32 %v2172, %v2244
  %2246 = vmatprep.mubr.bf16.mxu0 %v889
  %2247 = vmatmul.mubr.bf16.gmra.mxu0 %v888
  %v2248 = vpop.f32.mrf.mxu0
  %v2249 = vadd.f32 %v2176, %v2248
  %v2250 = vpop.f32.mrf.mxu0
  %v2251 = vadd.f32 %v2178, %v2250
  %v2252 = vpop.f32.mrf.mxu0
  %v2253 = vadd.f32 %v2180, %v2252
  %v2254 = vpop.f32.mrf.mxu0
  %v2255 = vadd.f32 %v2182, %v2254
  %2256 = vmatprep.mubr.bf16.mxu0 %v895
  %2257 = vmatmul.mubr.bf16.gmra.mxu0 %v894
  %v2258 = vpop.f32.mrf.mxu0
  %v2259 = vadd.f32 %v2186, %v2258
  %v2260 = vpop.f32.mrf.mxu0
  %v2261 = vadd.f32 %v2188, %v2260
  %v2262 = vpop.f32.mrf.mxu0
  %v2263 = vadd.f32 %v2190, %v2262
  %v2264 = vpop.f32.mrf.mxu0
  %v2265 = vadd.f32 %v2192, %v2264
  %2266 = vdwg.mxu0
  %2267 = vmatprep.subr.bf16.mxu0 %v1695
  %2268 = vmatpush1.bf16.msra.mxu0 %v1694
  %2269 = vmatprep.subr.bf16.mxu0 %v1691
  %2270 = vmatpush1.bf16.msra.mxu0 %v1690
  %2271 = vmatprep.subr.bf16.mxu0 %v1687
  %2272 = vmatpush1.bf16.msra.mxu0 %v1686
  %2273 = vmatprep.subr.bf16.mxu0 %v1683
  %2274 = vmatpush1.bf16.msra.mxu0 %v1682
  %2275 = vmatprep.subr.bf16.mxu0 %v1679
  %2276 = vmatpush1.bf16.msra.mxu0 %v1678
  %2277 = vmatprep.subr.bf16.mxu0 %v1675
  %2278 = vmatpush1.bf16.msra.mxu0 %v1674
  %2279 = vmatprep.subr.bf16.mxu0 %v1671
  %2280 = vmatpush1.bf16.msra.mxu0 %v1670
  %2281 = vmatprep.subr.bf16.mxu0 %v1667
  %2282 = vmatpush1.bf16.msra.mxu0 %v1666
  %2283 = vmatprep.subr.bf16.mxu0 %v1727
  %2284 = vmatpush2.bf16.msra.mxu0 %v1726
  %2285 = vmatprep.subr.bf16.mxu0 %v1723
  %2286 = vmatpush2.bf16.msra.mxu0 %v1722
  %2287 = vmatprep.subr.bf16.mxu0 %v1719
  %2288 = vmatpush2.bf16.msra.mxu0 %v1718
  %2289 = vmatprep.subr.bf16.mxu0 %v1715
  %2290 = vmatpush2.bf16.msra.mxu0 %v1714
  %2291 = vmatprep.subr.bf16.mxu0 %v1711
  %2292 = vmatpush2.bf16.msra.mxu0 %v1710
  %2293 = vmatprep.subr.bf16.mxu0 %v1707
  %2294 = vmatpush2.bf16.msra.mxu0 %v1706
  %2295 = vmatprep.subr.bf16.mxu0 %v1703
  %2296 = vmatpush2.bf16.msra.mxu0 %v1702
  %2297 = vmatprep.subr.bf16.mxu0 %v1699
  %2298 = vmatpush2.bf16.msra.mxu0 %v1698
  %2299 = vmatprep.mubr.bf16.mxu0 %v873
  %2300 = vmatmul.mubr.bf16.gmra.mxu0 %v872
  %v2301 = vpop.f32.mrf.mxu0
  %v2302 = vadd.f32 0.0, %v2301
  %v2303 = vpop.f32.mrf.mxu0
  %v2304 = vadd.f32 0.0, %v2303
  %v2305 = vpop.f32.mrf.mxu0
  %v2306 = vadd.f32 0.0, %v2305
  %v2307 = vpop.f32.mrf.mxu0
  %v2308 = vadd.f32 0.0, %v2307
  %2309 = vmatprep.mubr.bf16.mxu0 %v879
  %2310 = vmatmul.mubr.bf16.gmra.mxu0 %v878
  %v2311 = vpop.f32.mrf.mxu0
  %v2312 = vadd.f32 0.0, %v2311
  %v2313 = vpop.f32.mrf.mxu0
  %v2314 = vadd.f32 0.0, %v2313
  %v2315 = vpop.f32.mrf.mxu0
  %v2316 = vadd.f32 0.0, %v2315
  %v2317 = vpop.f32.mrf.mxu0
  %v2318 = vadd.f32 0.0, %v2317
  %2319 = vmatprep.mubr.bf16.mxu0 %v885
  %2320 = vmatmul.mubr.bf16.gmra.mxu0 %v884
  %v2321 = vpop.f32.mrf.mxu0
  %v2322 = vadd.f32 0.0, %v2321
  %v2323 = vpop.f32.mrf.mxu0
  %v2324 = vadd.f32 0.0, %v2323
  %v2325 = vpop.f32.mrf.mxu0
  %v2326 = vadd.f32 0.0, %v2325
  %v2327 = vpop.f32.mrf.mxu0
  %v2328 = vadd.f32 0.0, %v2327
  %2329 = vmatprep.mubr.bf16.mxu0 %v891
  %2330 = vmatmul.mubr.bf16.gmra.mxu0 %v890
  %v2331 = vpop.f32.mrf.mxu0
  %v2332 = vadd.f32 0.0, %v2331
  %v2333 = vpop.f32.mrf.mxu0
  %v2334 = vadd.f32 0.0, %v2333
  %v2335 = vpop.f32.mrf.mxu0
  %v2336 = vadd.f32 0.0, %v2335
  %v2337 = vpop.f32.mrf.mxu0
  %v2338 = vadd.f32 0.0, %v2337
  %2339 = vdwg.mxu0
  %2340 = vmatprep.subr.bf16.mxu0 %v1759
  %2341 = vmatpush1.bf16.msra.mxu0 %v1758
  %2342 = vmatprep.subr.bf16.mxu0 %v1755
  %2343 = vmatpush1.bf16.msra.mxu0 %v1754
  %2344 = vmatprep.subr.bf16.mxu0 %v1751
  %2345 = vmatpush1.bf16.msra.mxu0 %v1750
  %2346 = vmatprep.subr.bf16.mxu0 %v1747
  %2347 = vmatpush1.bf16.msra.mxu0 %v1746
  %2348 = vmatprep.subr.bf16.mxu0 %v1743
  %2349 = vmatpush1.bf16.msra.mxu0 %v1742
  %2350 = vmatprep.subr.bf16.mxu0 %v1739
  %2351 = vmatpush1.bf16.msra.mxu0 %v1738
  %2352 = vmatprep.subr.bf16.mxu0 %v1735
  %2353 = vmatpush1.bf16.msra.mxu0 %v1734
  %2354 = vmatprep.subr.bf16.mxu0 %v1731
  %2355 = vmatpush1.bf16.msra.mxu0 %v1730
  %2356 = vmatprep.subr.bf16.mxu0 %v1791
  %2357 = vmatpush2.bf16.msra.mxu0 %v1790
  %2358 = vmatprep.subr.bf16.mxu0 %v1787
  %2359 = vmatpush2.bf16.msra.mxu0 %v1786
  %2360 = vmatprep.subr.bf16.mxu0 %v1783
  %2361 = vmatpush2.bf16.msra.mxu0 %v1782
  %2362 = vmatprep.subr.bf16.mxu0 %v1779
  %2363 = vmatpush2.bf16.msra.mxu0 %v1778
  %2364 = vmatprep.subr.bf16.mxu0 %v1775
  %2365 = vmatpush2.bf16.msra.mxu0 %v1774
  %2366 = vmatprep.subr.bf16.mxu0 %v1771
  %2367 = vmatpush2.bf16.msra.mxu0 %v1770
  %2368 = vmatprep.subr.bf16.mxu0 %v1767
  %2369 = vmatpush2.bf16.msra.mxu0 %v1766
  %2370 = vmatprep.subr.bf16.mxu0 %v1763
  %2371 = vmatpush2.bf16.msra.mxu0 %v1762
  %2372 = vmatprep.mubr.bf16.mxu0 %v875
  %2373 = vmatmul.mubr.bf16.gmra.mxu0 %v874
  %v2374 = vpop.f32.mrf.mxu0
  %v2375 = vadd.f32 %v2302, %v2374
  %v2376 = vpop.f32.mrf.mxu0
  %v2377 = vadd.f32 %v2304, %v2376
  %v2378 = vpop.f32.mrf.mxu0
  %v2379 = vadd.f32 %v2306, %v2378
  %v2380 = vpop.f32.mrf.mxu0
  %v2381 = vadd.f32 %v2308, %v2380
  %2382 = vmatprep.mubr.bf16.mxu0 %v881
  %2383 = vmatmul.mubr.bf16.gmra.mxu0 %v880
  %v2384 = vpop.f32.mrf.mxu0
  %v2385 = vadd.f32 %v2312, %v2384
  %v2386 = vpop.f32.mrf.mxu0
  %v2387 = vadd.f32 %v2314, %v2386
  %v2388 = vpop.f32.mrf.mxu0
  %v2389 = vadd.f32 %v2316, %v2388
  %v2390 = vpop.f32.mrf.mxu0
  %v2391 = vadd.f32 %v2318, %v2390
  %2392 = vmatprep.mubr.bf16.mxu0 %v887
  %2393 = vmatmul.mubr.bf16.gmra.mxu0 %v886
  %v2394 = vpop.f32.mrf.mxu0
  %v2395 = vadd.f32 %v2322, %v2394
  %v2396 = vpop.f32.mrf.mxu0
  %v2397 = vadd.f32 %v2324, %v2396
  %v2398 = vpop.f32.mrf.mxu0
  %v2399 = vadd.f32 %v2326, %v2398
  %v2400 = vpop.f32.mrf.mxu0
  %v2401 = vadd.f32 %v2328, %v2400
  %2402 = vmatprep.mubr.bf16.mxu0 %v893
  %2403 = vmatmul.mubr.bf16.gmra.mxu0 %v892
  %v2404 = vpop.f32.mrf.mxu0
  %v2405 = vadd.f32 %v2332, %v2404
  %v2406 = vpop.f32.mrf.mxu0
  %v2407 = vadd.f32 %v2334, %v2406
  %v2408 = vpop.f32.mrf.mxu0
  %v2409 = vadd.f32 %v2336, %v2408
  %v2410 = vpop.f32.mrf.mxu0
  %v2411 = vadd.f32 %v2338, %v2410
  %2412 = vdwg.mxu0
  %2413 = vmatprep.subr.bf16.mxu0 %v1823
  %2414 = vmatpush1.bf16.msra.mxu0 %v1822
  %2415 = vmatprep.subr.bf16.mxu0 %v1819
  %2416 = vmatpush1.bf16.msra.mxu0 %v1818
  %2417 = vmatprep.subr.bf16.mxu0 %v1815
  %2418 = vmatpush1.bf16.msra.mxu0 %v1814
  %2419 = vmatprep.subr.bf16.mxu0 %v1811
  %2420 = vmatpush1.bf16.msra.mxu0 %v1810
  %2421 = vmatprep.subr.bf16.mxu0 %v1807
  %2422 = vmatpush1.bf16.msra.mxu0 %v1806
  %2423 = vmatprep.subr.bf16.mxu0 %v1803
  %2424 = vmatpush1.bf16.msra.mxu0 %v1802
  %2425 = vmatprep.subr.bf16.mxu0 %v1799
  %2426 = vmatpush1.bf16.msra.mxu0 %v1798
  %2427 = vmatprep.subr.bf16.mxu0 %v1795
  %2428 = vmatpush1.bf16.msra.mxu0 %v1794
  %2429 = vmatprep.subr.bf16.mxu0 %v1855
  %2430 = vmatpush2.bf16.msra.mxu0 %v1854
  %2431 = vmatprep.subr.bf16.mxu0 %v1851
  %2432 = vmatpush2.bf16.msra.mxu0 %v1850
  %2433 = vmatprep.subr.bf16.mxu0 %v1847
  %2434 = vmatpush2.bf16.msra.mxu0 %v1846
  %2435 = vmatprep.subr.bf16.mxu0 %v1843
  %2436 = vmatpush2.bf16.msra.mxu0 %v1842
  %2437 = vmatprep.subr.bf16.mxu0 %v1839
  %2438 = vmatpush2.bf16.msra.mxu0 %v1838
  %2439 = vmatprep.subr.bf16.mxu0 %v1835
  %2440 = vmatpush2.bf16.msra.mxu0 %v1834
  %2441 = vmatprep.subr.bf16.mxu0 %v1831
  %2442 = vmatpush2.bf16.msra.mxu0 %v1830
  %2443 = vmatprep.subr.bf16.mxu0 %v1827
  %2444 = vmatpush2.bf16.msra.mxu0 %v1826
  %2445 = vmatprep.mubr.bf16.mxu0 %v877
  %2446 = vmatmul.mubr.bf16.gmra.mxu0 %v876
  %v2447 = vpop.f32.mrf.mxu0
  %v2448 = vadd.f32 %v2375, %v2447
  %v2449 = vpop.f32.mrf.mxu0
  %v2450 = vadd.f32 %v2377, %v2449
  %v2451 = vpop.f32.mrf.mxu0
  %v2452 = vadd.f32 %v2379, %v2451
  %v2453 = vpop.f32.mrf.mxu0
  %v2454 = vadd.f32 %v2381, %v2453
  %2455 = vmatprep.mubr.bf16.mxu0 %v883
  %2456 = vmatmul.mubr.bf16.gmra.mxu0 %v882
  %v2457 = vpop.f32.mrf.mxu0
  %v2458 = vadd.f32 %v2385, %v2457
  %v2459 = vpop.f32.mrf.mxu0
  %v2460 = vadd.f32 %v2387, %v2459
  %v2461 = vpop.f32.mrf.mxu0
  %v2462 = vadd.f32 %v2389, %v2461
  %v2463 = vpop.f32.mrf.mxu0
  %v2464 = vadd.f32 %v2391, %v2463
  %2465 = vmatprep.mubr.bf16.mxu0 %v889
  %2466 = vmatmul.mubr.bf16.gmra.mxu0 %v888
  %v2467 = vpop.f32.mrf.mxu0
  %v2468 = vadd.f32 %v2395, %v2467
  %v2469 = vpop.f32.mrf.mxu0
  %v2470 = vadd.f32 %v2397, %v2469
  %v2471 = vpop.f32.mrf.mxu0
  %v2472 = vadd.f32 %v2399, %v2471
  %v2473 = vpop.f32.mrf.mxu0
  %v2474 = vadd.f32 %v2401, %v2473
  %2475 = vmatprep.mubr.bf16.mxu0 %v895
  %2476 = vmatmul.mubr.bf16.gmra.mxu0 %v894
  %v2477 = vpop.f32.mrf.mxu0
  %v2478 = vadd.f32 %v2405, %v2477
  %v2479 = vpop.f32.mrf.mxu0
  %v2480 = vadd.f32 %v2407, %v2479
  %v2481 = vpop.f32.mrf.mxu0
  %v2482 = vadd.f32 %v2409, %v2481
  %v2483 = vpop.f32.mrf.mxu0
  %v2484 = vadd.f32 %v2411, %v2483
  %2485 = vdwg.mxu0
  %v2486 = vmax.f32 %v2229, %v2231
  %v2487 = vmax.f32 %v2233, %v2235
  %v2488 = vmax.f32 %v2239, %v2241
  %v2489 = vmax.f32 %v2243, %v2245
  %v2490 = vmax.f32 %v2249, %v2251
  %v2491 = vmax.f32 %v2253, %v2255
  %v2492 = vmax.f32 %v2259, %v2261
  %v2493 = vmax.f32 %v2263, %v2265
  %v2494 = vmax.f32 %v2448, %v2450
  %v2495 = vmax.f32 %v2452, %v2454
  %v2496 = vmax.f32 %v2458, %v2460
  %v2497 = vmax.f32 %v2462, %v2464
  %v2498 = vmax.f32 %v2468, %v2470
  %v2499 = vmax.f32 %v2472, %v2474
  %v2500 = vmax.f32 %v2478, %v2480
  %v2501 = vmax.f32 %v2482, %v2484
  %v2502 = vmax.f32 %v2486, %v2494
  %v2503 = vmax.f32 %v2487, %v2495
  %v2504 = vmax.f32 %v2488, %v2496
  %v2505 = vmax.f32 %v2489, %v2497
  %v2506 = vmax.f32 %v2490, %v2498
  %v2507 = vmax.f32 %v2491, %v2499
  %v2508 = vmax.f32 %v2492, %v2500
  %v2509 = vmax.f32 %v2493, %v2501
  %v2510 = vld [vmem:[%s4] sm:$0x1]
  %v2512 = vlaneseq
  %v2513 = vshrl.u32 %v2512, 7
  %v2514 = vsub.s32 0, %v2513
  %v2515 = vrot.slane %v2510, %v2514
  %v2517 = vadd.f32 %v2502, %v2515
  %v2518 = vadd.f32 %v2503, %v2515
  %v2519 = vadd.f32 %v2504, %v2515
  %v2520 = vadd.f32 %v2505, %v2515
  %v2521 = vadd.f32 %v2506, %v2515
  %v2522 = vadd.f32 %v2507, %v2515
  %v2523 = vadd.f32 %v2508, %v2515
  %v2524 = vadd.f32 %v2509, %v2515
  %v2525 = vmax.f32 %v2517, 0.0
  %v2526 = vmax.f32 %v2518, 0.0
  %v2527 = vmax.f32 %v2519, 0.0
  %v2528 = vmax.f32 %v2520, 0.0
  %v2529 = vmax.f32 %v2521, 0.0
  %v2530 = vmax.f32 %v2522, 0.0
  %v2531 = vmax.f32 %v2523, 0.0
  %v2532 = vmax.f32 %v2524, 0.0
  %v2533 = vpack.c.bf16 %v2525, %v2525
  %v2534 = vpack.c.bf16 %v2526, %v2526
  %v2535 = vpack.c.bf16 %v2527, %v2527
  %v2536 = vpack.c.bf16 %v2528, %v2528
  %v2537 = vpack.c.bf16 %v2529, %v2529
  %v2538 = vpack.c.bf16 %v2530, %v2530
  %v2539 = vpack.c.bf16 %v2531, %v2531
  %v2540 = vpack.c.bf16 %v2532, %v2532
  %v2541 = vld [vmem:[%s5] sm:$0xf]
  %v2542 = vld [vmem:[%s5 + $0x4] sm:$0xf]
  %v2543 = vld [vmem:[%s5 + $0x8] sm:$0xf]
  %v2544 = vld [vmem:[%s5 + $0xc] sm:$0xf]
  %v2545 = vld [vmem:[%s5 + $0x10] sm:$0xf]
  %v2546 = vld [vmem:[%s5 + $0x14] sm:$0xf]
  %v2547 = vld [vmem:[%s5 + $0x18] sm:$0xf]
  %v2548 = vld [vmem:[%s5 + $0x1c] sm:$0xf]
  %v2549 = vld [vmem:[%s5 + $0x20] sm:$0xf]
  %v2550 = vld [vmem:[%s5 + $0x24] sm:$0xf]
  %v2551 = vld [vmem:[%s5 + $0x28] sm:$0xf]
  %v2552 = vld [vmem:[%s5 + $0x2c] sm:$0xf]
  %v2553 = vld [vmem:[%s5 + $0x30] sm:$0xf]
  %v2554 = vld [vmem:[%s5 + $0x34] sm:$0xf]
  %v2555 = vld [vmem:[%s5 + $0x38] sm:$0xf]
  %v2556 = vld [vmem:[%s5 + $0x3c] sm:$0xf]
  %s2557 = scalar_lea.vmem %s5, 64
  %v2558 = vld [vmem:[%s2557] sm:$0xf]
  %v2559 = vld [vmem:[%s2557 + $0x4] sm:$0xf]
  %v2560 = vld [vmem:[%s2557 + $0x8] sm:$0xf]
  %v2561 = vld [vmem:[%s2557 + $0xc] sm:$0xf]
  %v2562 = vld [vmem:[%s2557 + $0x10] sm:$0xf]
  %v2563 = vld [vmem:[%s2557 + $0x14] sm:$0xf]
  %v2564 = vld [vmem:[%s2557 + $0x18] sm:$0xf]
  %v2565 = vld [vmem:[%s2557 + $0x1c] sm:$0xf]
  %v2566 = vld [vmem:[%s2557 + $0x20] sm:$0xf]
  %v2567 = vld [vmem:[%s2557 + $0x24] sm:$0xf]
  %v2568 = vld [vmem:[%s2557 + $0x28] sm:$0xf]
  %v2569 = vld [vmem:[%s2557 + $0x2c] sm:$0xf]
  %v2570 = vld [vmem:[%s2557 + $0x30] sm:$0xf]
  %v2571 = vld [vmem:[%s2557 + $0x34] sm:$0xf]
  %v2572 = vld [vmem:[%s2557 + $0x38] sm:$0xf]
  %v2573 = vld [vmem:[%s2557 + $0x3c] sm:$0xf]
  %v2582 = vunpack.c.l.b16 %v2533
  %v2583 = vunpack.c.l.b16 %v2534
  %v2584 = vunpack.c.l.b16 %v2535
  %v2585 = vunpack.c.l.b16 %v2536
  %v2586 = vunpack.c.l.b16 %v2537
  %v2587 = vunpack.c.l.b16 %v2538
  %v2588 = vunpack.c.l.b16 %v2539
  %v2589 = vunpack.c.l.b16 %v2540
  %v2590 = vrot.slane %v2582, 1
  %vm2591 = vcmask 1041409
  %v2592 = vsel %vm2591, %v2583, %v2590
  %v2593 = vrot.slane %v2584, 7
  %vm2594 = vcmask 1042434
  %v2595 = vsel %vm2594, %v2593, %v2592
  %v2596 = vrot.slane %v2585, 6
  %vm2597 = vcmask 1043459
  %v2598 = vsel %vm2597, %v2596, %v2595
  %v2599 = vrot.slane %v2586, 5
  %vm2600 = vcmask 1044484
  %v2601 = vsel %vm2600, %v2599, %v2598
  %v2602 = vrot.slane %v2587, 4
  %vm2603 = vcmask 1045509
  %v2604 = vsel %vm2603, %v2602, %v2601
  %v2605 = vrot.slane %v2588, 3
  %vm2606 = vcmask 1046534
  %v2607 = vsel %vm2606, %v2605, %v2604
  %v2608 = vrot.slane %v2589, 2
  %vm2609 = vcmask 1047559
  %v2610 = vsel %vm2609, %v2608, %v2607
  %v2611 = vpack.c.b16 %v2610, %v2610
  %v2629 = vunpack.c.l.b16 %v2558
  %v2630 = vunpack.c.l.b16 %v2559
  %v2631 = vunpack.c.l.b16 %v2560
  %v2632 = vunpack.c.l.b16 %v2561
  %v2633 = vunpack.c.l.b16 %v2562
  %v2634 = vunpack.c.l.b16 %v2563
  %v2635 = vunpack.c.l.b16 %v2564
  %v2636 = vunpack.c.l.b16 %v2565
  %v2637 = vunpack.c.l.b16 %v2566
  %v2638 = vunpack.c.l.b16 %v2567
  %v2639 = vunpack.c.l.b16 %v2568
  %v2640 = vunpack.c.l.b16 %v2569
  %v2641 = vunpack.c.l.b16 %v2570
  %v2642 = vunpack.c.l.b16 %v2571
  %v2643 = vunpack.c.l.b16 %v2572
  %v2644 = vunpack.c.l.b16 %v2573
  %v2645 = vpack.c.b16 %v2630, %v2629
  %v2646 = vpack.c.b16 %v2632, %v2631
  %v2647 = vpack.c.b16 %v2634, %v2633
  %v2648 = vpack.c.b16 %v2636, %v2635
  %v2649 = vpack.c.b16 %v2638, %v2637
  %v2650 = vpack.c.b16 %v2640, %v2639
  %v2651 = vpack.c.b16 %v2642, %v2641
  %v2652 = vpack.c.b16 %v2644, %v2643
  %2661 = vmatprep.subr.bf16.mxu0 0
  %2662 = vmatpush1.bf16.msra.mxu0 %v2652
  %2663 = vmatprep.subr.bf16.mxu0 0
  %2664 = vmatpush1.bf16.msra.mxu0 %v2651
  %2665 = vmatprep.subr.bf16.mxu0 0
  %2666 = vmatpush1.bf16.msra.mxu0 %v2650
  %2667 = vmatprep.subr.bf16.mxu0 0
  %2668 = vmatpush1.bf16.msra.mxu0 %v2649
  %2669 = vmatprep.subr.bf16.mxu0 0
  %2670 = vmatpush1.bf16.msra.mxu0 %v2648
  %2671 = vmatprep.subr.bf16.mxu0 0
  %2672 = vmatpush1.bf16.msra.mxu0 %v2647
  %2673 = vmatprep.subr.bf16.mxu0 0
  %2674 = vmatpush1.bf16.msra.mxu0 %v2646
  %2675 = vmatprep.subr.bf16.mxu0 0
  %2676 = vmatpush1.bf16.msra.mxu0 %v2645
  %2677 = vmatprep.subr.bf16.mxu0 0
  %2678 = vmatpush2.bf16.msra.mxu0 0
  %2679 = vmatprep.subr.bf16.mxu0 0
  %2680 = vmatpush2.bf16.msra.mxu0 0
  %2681 = vmatprep.subr.bf16.mxu0 0
  %2682 = vmatpush2.bf16.msra.mxu0 0
  %2683 = vmatprep.subr.bf16.mxu0 0
  %2684 = vmatpush2.bf16.msra.mxu0 0
  %2685 = vmatprep.subr.bf16.mxu0 0
  %2686 = vmatpush2.bf16.msra.mxu0 0
  %2687 = vmatprep.subr.bf16.mxu0 0
  %2688 = vmatpush2.bf16.msra.mxu0 0
  %2689 = vmatprep.subr.bf16.mxu0 0
  %2690 = vmatpush2.bf16.msra.mxu0 0
  %2691 = vmatprep.subr.bf16.mxu0 0
  %2692 = vmatpush2.bf16.msra.mxu0 0
  %2693 = vmatprep.mubr.bf16.mxu0 0
  %2694 = vmatmul.mubr.bf16.gmra.mxu0 %v2611
  %v2695 = vpop.f32.mrf.mxu0
  %v2696 = vadd.f32 0.0, %v2695
  %v2697 = vpop.f32.mrf.mxu0
  %v2698 = vpop.f32.mrf.mxu0
  %v2699 = vpop.f32.mrf.mxu0
  %2700 = vdwg.mxu0
  %v2701 = vrot.slane %v2583, 7
  %v2702 = vsel %vm2591, %v2701, %v2582
  %v2703 = vrot.slane %v2584, 6
  %v2704 = vsel %vm2594, %v2703, %v2702
  %v2705 = vrot.slane %v2585, 5
  %v2706 = vsel %vm2597, %v2705, %v2704
  %v2707 = vrot.slane %v2586, 4
  %v2708 = vsel %vm2600, %v2707, %v2706
  %v2709 = vrot.slane %v2587, 3
  %v2710 = vsel %vm2603, %v2709, %v2708
  %v2711 = vrot.slane %v2588, 2
  %v2712 = vsel %vm2606, %v2711, %v2710
  %v2713 = vrot.slane %v2589, 1
  %v2714 = vsel %vm2609, %v2713, %v2712
  %v2715 = vpack.c.b16 %v2714, %v2714
  %v2733 = vunpack.c.l.b16 %v2541
  %v2734 = vunpack.c.l.b16 %v2542
  %v2735 = vunpack.c.l.b16 %v2543
  %v2736 = vunpack.c.l.b16 %v2544
  %v2737 = vunpack.c.l.b16 %v2545
  %v2738 = vunpack.c.l.b16 %v2546
  %v2739 = vunpack.c.l.b16 %v2547
  %v2740 = vunpack.c.l.b16 %v2548
  %v2741 = vunpack.c.l.b16 %v2549
  %v2742 = vunpack.c.l.b16 %v2550
  %v2743 = vunpack.c.l.b16 %v2551
  %v2744 = vunpack.c.l.b16 %v2552
  %v2745 = vunpack.c.l.b16 %v2553
  %v2746 = vunpack.c.l.b16 %v2554
  %v2747 = vunpack.c.l.b16 %v2555
  %v2748 = vunpack.c.l.b16 %v2556
  %v2749 = vpack.c.b16 %v2734, %v2733
  %v2750 = vpack.c.b16 %v2736, %v2735
  %v2751 = vpack.c.b16 %v2738, %v2737
  %v2752 = vpack.c.b16 %v2740, %v2739
  %v2753 = vpack.c.b16 %v2742, %v2741
  %v2754 = vpack.c.b16 %v2744, %v2743
  %v2755 = vpack.c.b16 %v2746, %v2745
  %v2756 = vpack.c.b16 %v2748, %v2747
  %2765 = vmatprep.subr.bf16.mxu0 0
  %2766 = vmatpush1.bf16.msra.mxu0 %v2756
  %2767 = vmatprep.subr.bf16.mxu0 0
  %2768 = vmatpush1.bf16.msra.mxu0 %v2755
  %2769 = vmatprep.subr.bf16.mxu0 0
  %2770 = vmatpush1.bf16.msra.mxu0 %v2754
  %2771 = vmatprep.subr.bf16.mxu0 0
  %2772 = vmatpush1.bf16.msra.mxu0 %v2753
  %2773 = vmatprep.subr.bf16.mxu0 0
  %2774 = vmatpush1.bf16.msra.mxu0 %v2752
  %2775 = vmatprep.subr.bf16.mxu0 0
  %2776 = vmatpush1.bf16.msra.mxu0 %v2751
  %2777 = vmatprep.subr.bf16.mxu0 0
  %2778 = vmatpush1.bf16.msra.mxu0 %v2750
  %2779 = vmatprep.subr.bf16.mxu0 0
  %2780 = vmatpush1.bf16.msra.mxu0 %v2749
  %2781 = vmatprep.subr.bf16.mxu0 0
  %2782 = vmatpush2.bf16.msra.mxu0 0
  %2783 = vmatprep.subr.bf16.mxu0 0
  %2784 = vmatpush2.bf16.msra.mxu0 0
  %2785 = vmatprep.subr.bf16.mxu0 0
  %2786 = vmatpush2.bf16.msra.mxu0 0
  %2787 = vmatprep.subr.bf16.mxu0 0
  %2788 = vmatpush2.bf16.msra.mxu0 0
  %2789 = vmatprep.subr.bf16.mxu0 0
  %2790 = vmatpush2.bf16.msra.mxu0 0
  %2791 = vmatprep.subr.bf16.mxu0 0
  %2792 = vmatpush2.bf16.msra.mxu0 0
  %2793 = vmatprep.subr.bf16.mxu0 0
  %2794 = vmatpush2.bf16.msra.mxu0 0
  %2795 = vmatprep.subr.bf16.mxu0 0
  %2796 = vmatpush2.bf16.msra.mxu0 0
  %2797 = vmatprep.mubr.bf16.mxu0 0
  %2798 = vmatmul.mubr.bf16.gmra.mxu0 %v2715
  %v2799 = vpop.f32.mrf.mxu0
  %v2800 = vadd.f32 %v2696, %v2799
  %v2801 = vpop.f32.mrf.mxu0
  %v2802 = vpop.f32.mrf.mxu0
  %v2803 = vpop.f32.mrf.mxu0
  %2804 = vdwg.mxu0
  %s2805 = scalar_lea.vmem %s5, 128
  %v2806 = vld [vmem:[%s2805] sm:$0xf]
  %v2807 = vld [vmem:[%s2805 + $0x4] sm:$0xf]
  %v2808 = vld [vmem:[%s2805 + $0x8] sm:$0xf]
  %v2809 = vld [vmem:[%s2805 + $0xc] sm:$0xf]
  %v2810 = vld [vmem:[%s2805 + $0x10] sm:$0xf]
  %v2811 = vld [vmem:[%s2805 + $0x14] sm:$0xf]
  %v2812 = vld [vmem:[%s2805 + $0x18] sm:$0xf]
  %v2813 = vld [vmem:[%s2805 + $0x1c] sm:$0xf]
  %v2814 = vld [vmem:[%s2805 + $0x20] sm:$0xf]
  %v2815 = vld [vmem:[%s2805 + $0x24] sm:$0xf]
  %v2816 = vld [vmem:[%s2805 + $0x28] sm:$0xf]
  %v2817 = vld [vmem:[%s2805 + $0x2c] sm:$0xf]
  %v2818 = vld [vmem:[%s2805 + $0x30] sm:$0xf]
  %v2819 = vld [vmem:[%s2805 + $0x34] sm:$0xf]
  %v2820 = vld [vmem:[%s2805 + $0x38] sm:$0xf]
  %v2821 = vld [vmem:[%s2805 + $0x3c] sm:$0xf]
  %v2822 = vrot.slane %v2582, 2
  %v2823 = vrot.slane %v2583, 1
  %v2824 = vsel %vm2591, %v2823, %v2822
  %v2825 = vsel %vm2594, %v2584, %v2824
  %v2826 = vrot.slane %v2585, 7
  %v2827 = vsel %vm2597, %v2826, %v2825
  %v2828 = vrot.slane %v2586, 6
  %v2829 = vsel %vm2600, %v2828, %v2827
  %v2830 = vrot.slane %v2587, 5
  %v2831 = vsel %vm2603, %v2830, %v2829
  %v2832 = vrot.slane %v2588, 4
  %v2833 = vsel %vm2606, %v2832, %v2831
  %v2834 = vrot.slane %v2589, 3
  %v2835 = vsel %vm2609, %v2834, %v2833
  %v2836 = vpack.c.b16 %v2835, %v2835
  %v2854 = vunpack.c.l.b16 %v2806
  %v2855 = vunpack.c.l.b16 %v2807
  %v2856 = vunpack.c.l.b16 %v2808
  %v2857 = vunpack.c.l.b16 %v2809
  %v2858 = vunpack.c.l.b16 %v2810
  %v2859 = vunpack.c.l.b16 %v2811
  %v2860 = vunpack.c.l.b16 %v2812
  %v2861 = vunpack.c.l.b16 %v2813
  %v2862 = vunpack.c.l.b16 %v2814
  %v2863 = vunpack.c.l.b16 %v2815
  %v2864 = vunpack.c.l.b16 %v2816
  %v2865 = vunpack.c.l.b16 %v2817
  %v2866 = vunpack.c.l.b16 %v2818
  %v2867 = vunpack.c.l.b16 %v2819
  %v2868 = vunpack.c.l.b16 %v2820
  %v2869 = vunpack.c.l.b16 %v2821
  %v2870 = vpack.c.b16 %v2855, %v2854
  %v2871 = vpack.c.b16 %v2857, %v2856
  %v2872 = vpack.c.b16 %v2859, %v2858
  %v2873 = vpack.c.b16 %v2861, %v2860
  %v2874 = vpack.c.b16 %v2863, %v2862
  %v2875 = vpack.c.b16 %v2865, %v2864
  %v2876 = vpack.c.b16 %v2867, %v2866
  %v2877 = vpack.c.b16 %v2869, %v2868
  %2886 = vmatprep.subr.bf16.mxu0 0
  %2887 = vmatpush1.bf16.msra.mxu0 %v2877
  %2888 = vmatprep.subr.bf16.mxu0 0
  %2889 = vmatpush1.bf16.msra.mxu0 %v2876
  %2890 = vmatprep.subr.bf16.mxu0 0
  %2891 = vmatpush1.bf16.msra.mxu0 %v2875
  %2892 = vmatprep.subr.bf16.mxu0 0
  %2893 = vmatpush1.bf16.msra.mxu0 %v2874
  %2894 = vmatprep.subr.bf16.mxu0 0
  %2895 = vmatpush1.bf16.msra.mxu0 %v2873
  %2896 = vmatprep.subr.bf16.mxu0 0
  %2897 = vmatpush1.bf16.msra.mxu0 %v2872
  %2898 = vmatprep.subr.bf16.mxu0 0
  %2899 = vmatpush1.bf16.msra.mxu0 %v2871
  %2900 = vmatprep.subr.bf16.mxu0 0
  %2901 = vmatpush1.bf16.msra.mxu0 %v2870
  %2902 = vmatprep.subr.bf16.mxu0 0
  %2903 = vmatpush2.bf16.msra.mxu0 0
  %2904 = vmatprep.subr.bf16.mxu0 0
  %2905 = vmatpush2.bf16.msra.mxu0 0
  %2906 = vmatprep.subr.bf16.mxu0 0
  %2907 = vmatpush2.bf16.msra.mxu0 0
  %2908 = vmatprep.subr.bf16.mxu0 0
  %2909 = vmatpush2.bf16.msra.mxu0 0
  %2910 = vmatprep.subr.bf16.mxu0 0
  %2911 = vmatpush2.bf16.msra.mxu0 0
  %2912 = vmatprep.subr.bf16.mxu0 0
  %2913 = vmatpush2.bf16.msra.mxu0 0
  %2914 = vmatprep.subr.bf16.mxu0 0
  %2915 = vmatpush2.bf16.msra.mxu0 0
  %2916 = vmatprep.subr.bf16.mxu0 0
  %2917 = vmatpush2.bf16.msra.mxu0 0
  %2918 = vmatprep.mubr.bf16.mxu0 0
  %2919 = vmatmul.mubr.bf16.gmra.mxu0 %v2836
  %v2920 = vpop.f32.mrf.mxu0
  %v2921 = vadd.f32 0.0, %v2920
  %v2922 = vpop.f32.mrf.mxu0
  %v2923 = vpop.f32.mrf.mxu0
  %v2924 = vpop.f32.mrf.mxu0
  %2925 = vdwg.mxu0
  %v2926 = vadd.f32 %v2800, %v2921
  %s2927 = scalar_lea.vmem %s5, 192
  %v2928 = vld [vmem:[%s2927] sm:$0xf]
  %v2929 = vld [vmem:[%s2927 + $0x4] sm:$0xf]
  %v2930 = vld [vmem:[%s2927 + $0x8] sm:$0xf]
  %v2931 = vld [vmem:[%s2927 + $0xc] sm:$0xf]
  %v2932 = vld [vmem:[%s2927 + $0x10] sm:$0xf]
  %v2933 = vld [vmem:[%s2927 + $0x14] sm:$0xf]
  %v2934 = vld [vmem:[%s2927 + $0x18] sm:$0xf]
  %v2935 = vld [vmem:[%s2927 + $0x1c] sm:$0xf]
  %v2936 = vld [vmem:[%s2927 + $0x20] sm:$0xf]
  %v2937 = vld [vmem:[%s2927 + $0x24] sm:$0xf]
  %v2938 = vld [vmem:[%s2927 + $0x28] sm:$0xf]
  %v2939 = vld [vmem:[%s2927 + $0x2c] sm:$0xf]
  %v2940 = vld [vmem:[%s2927 + $0x30] sm:$0xf]
  %v2941 = vld [vmem:[%s2927 + $0x34] sm:$0xf]
  %v2942 = vld [vmem:[%s2927 + $0x38] sm:$0xf]
  %v2943 = vld [vmem:[%s2927 + $0x3c] sm:$0xf]
  %v2944 = vrot.slane %v2582, 3
  %v2945 = vrot.slane %v2583, 2
  %v2946 = vsel %vm2591, %v2945, %v2944
  %v2947 = vrot.slane %v2584, 1
  %v2948 = vsel %vm2594, %v2947, %v2946
  %v2949 = vsel %vm2597, %v2585, %v2948
  %v2950 = vrot.slane %v2586, 7
  %v2951 = vsel %vm2600, %v2950, %v2949
  %v2952 = vrot.slane %v2587, 6
  %v2953 = vsel %vm2603, %v2952, %v2951
  %v2954 = vrot.slane %v2588, 5
  %v2955 = vsel %vm2606, %v2954, %v2953
  %v2956 = vrot.slane %v2589, 4
  %v2957 = vsel %vm2609, %v2956, %v2955
  %v2958 = vpack.c.b16 %v2957, %v2957
  %v2976 = vunpack.c.l.b16 %v2928
  %v2977 = vunpack.c.l.b16 %v2929
  %v2978 = vunpack.c.l.b16 %v2930
  %v2979 = vunpack.c.l.b16 %v2931
  %v2980 = vunpack.c.l.b16 %v2932
  %v2981 = vunpack.c.l.b16 %v2933
  %v2982 = vunpack.c.l.b16 %v2934
  %v2983 = vunpack.c.l.b16 %v2935
  %v2984 = vunpack.c.l.b16 %v2936
  %v2985 = vunpack.c.l.b16 %v2937
  %v2986 = vunpack.c.l.b16 %v2938
  %v2987 = vunpack.c.l.b16 %v2939
  %v2988 = vunpack.c.l.b16 %v2940
  %v2989 = vunpack.c.l.b16 %v2941
  %v2990 = vunpack.c.l.b16 %v2942
  %v2991 = vunpack.c.l.b16 %v2943
  %v2992 = vpack.c.b16 %v2977, %v2976
  %v2993 = vpack.c.b16 %v2979, %v2978
  %v2994 = vpack.c.b16 %v2981, %v2980
  %v2995 = vpack.c.b16 %v2983, %v2982
  %v2996 = vpack.c.b16 %v2985, %v2984
  %v2997 = vpack.c.b16 %v2987, %v2986
  %v2998 = vpack.c.b16 %v2989, %v2988
  %v2999 = vpack.c.b16 %v2991, %v2990
  %3008 = vmatprep.subr.bf16.mxu0 0
  %3009 = vmatpush1.bf16.msra.mxu0 %v2999
  %3010 = vmatprep.subr.bf16.mxu0 0
  %3011 = vmatpush1.bf16.msra.mxu0 %v2998
  %3012 = vmatprep.subr.bf16.mxu0 0
  %3013 = vmatpush1.bf16.msra.mxu0 %v2997
  %3014 = vmatprep.subr.bf16.mxu0 0
  %3015 = vmatpush1.bf16.msra.mxu0 %v2996
  %3016 = vmatprep.subr.bf16.mxu0 0
  %3017 = vmatpush1.bf16.msra.mxu0 %v2995
  %3018 = vmatprep.subr.bf16.mxu0 0
  %3019 = vmatpush1.bf16.msra.mxu0 %v2994
  %3020 = vmatprep.subr.bf16.mxu0 0
  %3021 = vmatpush1.bf16.msra.mxu0 %v2993
  %3022 = vmatprep.subr.bf16.mxu0 0
  %3023 = vmatpush1.bf16.msra.mxu0 %v2992
  %3024 = vmatprep.subr.bf16.mxu0 0
  %3025 = vmatpush2.bf16.msra.mxu0 0
  %3026 = vmatprep.subr.bf16.mxu0 0
  %3027 = vmatpush2.bf16.msra.mxu0 0
  %3028 = vmatprep.subr.bf16.mxu0 0
  %3029 = vmatpush2.bf16.msra.mxu0 0
  %3030 = vmatprep.subr.bf16.mxu0 0
  %3031 = vmatpush2.bf16.msra.mxu0 0
  %3032 = vmatprep.subr.bf16.mxu0 0
  %3033 = vmatpush2.bf16.msra.mxu0 0
  %3034 = vmatprep.subr.bf16.mxu0 0
  %3035 = vmatpush2.bf16.msra.mxu0 0
  %3036 = vmatprep.subr.bf16.mxu0 0
  %3037 = vmatpush2.bf16.msra.mxu0 0
  %3038 = vmatprep.subr.bf16.mxu0 0
  %3039 = vmatpush2.bf16.msra.mxu0 0
  %3040 = vmatprep.mubr.bf16.mxu0 0
  %3041 = vmatmul.mubr.bf16.gmra.mxu0 %v2958
  %v3042 = vpop.f32.mrf.mxu0
  %v3043 = vadd.f32 0.0, %v3042
  %v3044 = vpop.f32.mrf.mxu0
  %v3045 = vpop.f32.mrf.mxu0
  %v3046 = vpop.f32.mrf.mxu0
  %3047 = vdwg.mxu0
  %v3048 = vadd.f32 %v2926, %v3043
  %v3049 = vld [vmem:[%s6] sm:$0x1]
  %v3051 = vlaneseq
  %v3052 = vshrl.u32 %v3051, 7
  %v3053 = vsub.s32 0, %v3052
  %v3054 = vrot.slane %v3049, %v3053
  %v3056 = vadd.f32 %v3048, %v3054
  %v3057 = vmax.f32 %v3056, 0.0
  %v3058 = vpack.c.bf16 %v3057, %v3057
  %v3059 = vld [vmem:[%s7] sm:$0xf]
  %v3060 = vld [vmem:[%s7 + $0x4] sm:$0xf]
  %v3061 = vld [vmem:[%s7 + $0x8] sm:$0xf]
  %v3062 = vld [vmem:[%s7 + $0xc] sm:$0xf]
  %v3063 = vld [vmem:[%s7 + $0x10] sm:$0xf]
  %v3064 = vld [vmem:[%s7 + $0x14] sm:$0xf]
  %v3065 = vld [vmem:[%s7 + $0x18] sm:$0xf]
  %v3066 = vld [vmem:[%s7 + $0x1c] sm:$0xf]
  %v3067 = vld [vmem:[%s7 + $0x20] sm:$0xf]
  %v3068 = vld [vmem:[%s7 + $0x24] sm:$0xf]
  %v3069 = vld [vmem:[%s7 + $0x28] sm:$0xf]
  %v3070 = vld [vmem:[%s7 + $0x2c] sm:$0xf]
  %v3071 = vld [vmem:[%s7 + $0x30] sm:$0xf]
  %v3072 = vld [vmem:[%s7 + $0x34] sm:$0xf]
  %v3073 = vld [vmem:[%s7 + $0x38] sm:$0xf]
  %v3074 = vld [vmem:[%s7 + $0x3c] sm:$0xf]
  %v3075 = vld [vmem:[%s8] sm:$0x1]
  %v3077 = vlaneseq
  %v3078 = vshrl.u32 %v3077, 7
  %v3079 = vsub.s32 0, %v3078
  %v3080 = vrot.slane %v3075, %v3079
  %v3098 = vunpack.c.l.b16 %v3059
  %v3099 = vunpack.c.l.b16 %v3060
  %v3100 = vunpack.c.l.b16 %v3061
  %v3101 = vunpack.c.l.b16 %v3062
  %v3102 = vunpack.c.l.b16 %v3063
  %v3103 = vunpack.c.l.b16 %v3064
  %v3104 = vunpack.c.l.b16 %v3065
  %v3105 = vunpack.c.l.b16 %v3066
  %v3106 = vunpack.c.l.b16 %v3067
  %v3107 = vunpack.c.l.b16 %v3068
  %v3108 = vunpack.c.l.b16 %v3069
  %v3109 = vunpack.c.l.b16 %v3070
  %v3110 = vunpack.c.l.b16 %v3071
  %v3111 = vunpack.c.l.b16 %v3072
  %v3112 = vunpack.c.l.b16 %v3073
  %v3113 = vunpack.c.l.b16 %v3074
  %v3114 = vpack.c.b16 %v3099, %v3098
  %v3115 = vpack.c.b16 %v3101, %v3100
  %v3116 = vpack.c.b16 %v3103, %v3102
  %v3117 = vpack.c.b16 %v3105, %v3104
  %v3118 = vpack.c.b16 %v3107, %v3106
  %v3119 = vpack.c.b16 %v3109, %v3108
  %v3120 = vpack.c.b16 %v3111, %v3110
  %v3121 = vpack.c.b16 %v3113, %v3112
  %3130 = vmatprep.subr.bf16.mxu0 0
  %3131 = vmatpush1.bf16.msra.mxu0 %v3121
  %3132 = vmatprep.subr.bf16.mxu0 0
  %3133 = vmatpush1.bf16.msra.mxu0 %v3120
  %3134 = vmatprep.subr.bf16.mxu0 0
  %3135 = vmatpush1.bf16.msra.mxu0 %v3119
  %3136 = vmatprep.subr.bf16.mxu0 0
  %3137 = vmatpush1.bf16.msra.mxu0 %v3118
  %3138 = vmatprep.subr.bf16.mxu0 0
  %3139 = vmatpush1.bf16.msra.mxu0 %v3117
  %3140 = vmatprep.subr.bf16.mxu0 0
  %3141 = vmatpush1.bf16.msra.mxu0 %v3116
  %3142 = vmatprep.subr.bf16.mxu0 0
  %3143 = vmatpush1.bf16.msra.mxu0 %v3115
  %3144 = vmatprep.subr.bf16.mxu0 0
  %3145 = vmatpush1.bf16.msra.mxu0 %v3114
  %3146 = vmatprep.subr.bf16.mxu0 0
  %3147 = vmatpush2.bf16.msra.mxu0 0
  %3148 = vmatprep.subr.bf16.mxu0 0
  %3149 = vmatpush2.bf16.msra.mxu0 0
  %3150 = vmatprep.subr.bf16.mxu0 0
  %3151 = vmatpush2.bf16.msra.mxu0 0
  %3152 = vmatprep.subr.bf16.mxu0 0
  %3153 = vmatpush2.bf16.msra.mxu0 0
  %3154 = vmatprep.subr.bf16.mxu0 0
  %3155 = vmatpush2.bf16.msra.mxu0 0
  %3156 = vmatprep.subr.bf16.mxu0 0
  %3157 = vmatpush2.bf16.msra.mxu0 0
  %3158 = vmatprep.subr.bf16.mxu0 0
  %3159 = vmatpush2.bf16.msra.mxu0 0
  %3160 = vmatprep.subr.bf16.mxu0 0
  %3161 = vmatpush2.bf16.msra.mxu0 0
  %3162 = vmatprep.mubr.bf16.mxu0 0
  %3163 = vmatmul.mubr.bf16.gmra.mxu0 %v3058
  %v3164 = vpop.f32.mrf.mxu0
  %v3165 = vadd.f32 %v3080, %v3164
  %v3166 = vpop.f32.mrf.mxu0
  %v3167 = vpop.f32.mrf.mxu0
  %v3168 = vpop.f32.mrf.mxu0
  %3169 = vdwg.mxu0
  %3170 = vmax.xlane.f32.xlu0 %v3165
  %v3171 = vpop.xlane.xlu0 %3170
  %v3172 = vsub.f32 %v3165, %v3171
  %v3173 = vmul.f32 %v3172, 1.442695
  %v3174 = vpow.pop %v3173
  %3175 = vadd.xlane.f32.xlu0 %v3174
  %v3176 = vpop.xlane.xlu0 %3175
  %v3177 = vlog2.pop %v3176
  %v3178 = vmul.f32 %v3177, 0.6931472
  %v3179 = vsub.f32 %v3172, %v3178
  %3180 = vst [vmem:[%s9] sm:$0xff] %v3179
  // Predicated region
  $region38: #{net_forward.1} parent=0 // pred_check
    _
  $region39: #{net_forward.1} parent=0 // pred_check_branch
    %3182 = sbr.rel (0) target = $region41
  $region40: #{net_forward.1} parent=0 // pred_region
    _
  $region41: #{net_forward.1} parent=0 // pred_fallthru
    _
  // Predicated region
  $region42: #{net_forward.1} parent=0 // pred_check
    _
  $region43: #{net_forward.1} parent=0 // pred_check_branch
    %3184 = sbr.rel (0) target = $region45
  $region44: #{net_forward.1} parent=0 // pred_region
    _
  $region45: #{net_forward.1} parent=0 // pred_fallthru
    _

</llo_original>
